<compile_context>
chip_gen: v7x
topology: tpu7x:2x2x1
jax: 0.10.0
libtpu: 0.0.40
codegen_flags: <defaults>
</compile_context>

<pallas_src>
import numpy as np
import jax
import jax.numpy as jnp
from jax import lax
from jax.experimental import pallas as pl
from jax.experimental.pallas import tpu as pltpu

GRID_SIZE = 16
PAD_SIZE = 32
RADIUS = GRID_SIZE // 2
SIGMA = 1.5


def _custom_loss_kernel(sx_ref, sy_ref, cos_ref, sin_ref,      # (N, G*P) f32
                        trow_ref,                              # (2, G*M) f32 [ty; amp]
                        txc_ref,                               # (G*M, 1) f32
                        mask_ref,                              # (G*M, G*P) f32 block mask
                        fl_ref,                                # (2P, 2P) bf16 left DFT
                        r_ref,                                 # (2GP, 2GP) bf16 fused right DFT
                        out_ref,                               # (1, 1) f32 loss
                        pmax_sc, tmax_sc, sp_sc, st_sc, spt_sc):
    P = PAD_SIZE
    N, GP = sx_ref.shape
    GM = trow_ref.shape[1]
    pad_w = (PAD_SIZE - GRID_SIZE) // 2
    center = float(PAD_SIZE // 2)
    r2 = float(RADIUS * RADIUS)
    inv2s2 = 1.0 / (2.0 * SIGMA * SIGMA)
    g = pl.program_id(0)

    # ---- hoisted per-pixel constants (identical for every image in the slab)
    rows_i = lax.broadcasted_iota(jnp.int32, (P, GP), 0)
    colg_i = lax.broadcasted_iota(jnp.int32, (P, GP), 1)
    coll_i = colg_i & (P - 1)                  # column inside each 32-wide image
    rows = rows_i.astype(jnp.float32)
    coll = coll_i.astype(jnp.float32)
    gr = rows - float(pad_w)                   # inner-grid row coordinate
    gc = coll - float(pad_w)                   # inner-grid col coordinate
    gr2 = -2.0 * gr
    gc2 = -2.0 * gc
    inner = ((rows_i >= pad_w) & (rows_i < pad_w + GRID_SIZE) &
             (coll_i >= pad_w) & (coll_i < pad_w + GRID_SIZE))
    cdist2 = (rows - center) ** 2 + (coll - center) ** 2
    # Inner-grid circle ((i-8)^2+(j-8)^2 <= r^2) coincides exactly with the
    # padded-coordinate circle, so one circle serves both masks.
    valid = inner & (cdist2 <= r2)             # nearest-seed phase survives here
    outer = cdist2 > r2                        # phase forced to 0 here

    # ---- discrete voronoi: nearest seed (cheapened squared-distance compare)
    sx0 = sx_ref[0:1, :]
    sy0 = sy_ref[0:1, :]
    cos0 = cos_ref[0:1, :]
    sin0 = sin_ref[0:1, :]
    c0 = sx0 * sx0 + sy0 * sy0
    best_d2 = gr2 * sx0 + gc2 * sy0 + c0                       # (P, GP)
    best_c = jnp.broadcast_to(cos0, (P, GP))
    best_s = jnp.broadcast_to(sin0, (P, GP))

    def seed_body(n, carry):
        bd2, bc, bs = carry
        sxn = sx_ref[pl.ds(n, 1), :]
        syn = sy_ref[pl.ds(n, 1), :]
        cosn = cos_ref[pl.ds(n, 1), :]
        sinn = sin_ref[pl.ds(n, 1), :]
        cn = sxn * sxn + syn * syn             # (1, GP), negligible
        d2 = gr2 * sxn + gc2 * syn + cn        # == true d2 minus a pixel const
        upd = d2 < bd2                         # strict '<' keeps first index on ties
        return (jnp.where(upd, d2, bd2),
                jnp.where(upd, cosn, bc),
                jnp.where(upd, sinn, bs))

    best_d2, best_c, best_s = lax.fori_loop(
        1, N, seed_body, (best_d2, best_c, best_s), unroll=True)

    # pixels masked out of the voronoi / padding -> seed index 0 (reference
    # semantics); outside the support circle -> phase 0 -> 1 + 0j.
    cos_f = jnp.where(valid, best_c, cos0)
    sin_f = jnp.where(valid, best_s, sin0)
    xr = jnp.where(outer, 1.0, cos_f)
    xi = jnp.where(outer, 0.0, sin_f)

    # ---- fftshift(abs(fft2(fftshift(x)))): one left matmul + one fused right
    xri = jnp.concatenate([xr, xi], axis=0).astype(jnp.bfloat16)        # (2P, GP)
    ari = jnp.dot(fl_ref[...], xri, preferred_element_type=jnp.float32)  # (2P, GP)
    arai = jnp.concatenate([ari[:P, :], ari[P:, :]],
                           axis=1).astype(jnp.bfloat16)                 # (P, 2GP)
    yri = jnp.dot(arai, r_ref[...], preferred_element_type=jnp.float32)  # (P, 2GP)
    yr = yri[:, :GP]
    yi = yri[:, GP:]
    pdp = jnp.sqrt(yr * yr + yi * yi)                                   # (P, GP)

    # ---- target diffraction pattern: separable gaussian splats on the MXU
    ty_row = trow_ref[0:1, :]                                           # (1, GM)
    amp_row = trow_ref[1:2, :]                                          # (1, GM)
    rows_gm = lax.broadcasted_iota(jnp.int32, (P, GM), 0).astype(jnp.float32)
    a_big = amp_row * jnp.exp(-(rows_gm - ty_row) ** 2 * inv2s2)        # (P, GM)
    tx_col = txc_ref[...]                                               # (GM, 1)
    colg_b = lax.broadcasted_iota(jnp.int32, (GM, GP), 1)
    coll_b = (colg_b & (P - 1)).astype(jnp.float32)
    b_big = mask_ref[...] * jnp.exp(-(coll_b - tx_col) ** 2 * inv2s2)   # (GM, GP)
    tdp = jnp.dot(a_big, b_big, preferred_element_type=jnp.float32)     # (P, GP)

    # ---- chi-square: accumulate raw sums / maxes across grid steps
    @pl.when(g == 0)
    def _():
        pmax_sc[...] = jnp.zeros_like(pmax_sc)   # pdp/tdp are >= 0
        tmax_sc[...] = jnp.zeros_like(tmax_sc)
        sp_sc[...] = jnp.zeros_like(sp_sc)
        st_sc[...] = jnp.zeros_like(st_sc)
        spt_sc[...] = jnp.zeros_like(spt_sc)

    pmax_sc[...] = jnp.maximum(pmax_sc[...], jnp.max(pdp, keepdims=True))
    tmax_sc[...] = jnp.maximum(tmax_sc[...], jnp.max(tdp, keepdims=True))
    sp_sc[...] += jnp.sum(pdp * pdp, keepdims=True)
    st_sc[...] += jnp.sum(tdp * tdp, keepdims=True)
    spt_sc[...] += jnp.sum(pdp * tdp, keepdims=True)

    @pl.when(g == pl.num_programs(0) - 1)
    def _():
        sp = sp_sc[...]
        st = st_sc[...]
        spt = spt_sc[...]
        pm = pmax_sc[...]
        tm = tmax_sc[...]
        # sum((p/pm - t/tm)^2) / sqrt(sum((p/pm)^2) * sum((t/tm)^2))
        #   == (Sp*tm/pm + St*pm/tm - 2*Spt) / sqrt(Sp*St)
        # (no guard on pm/tm == 0, same as the PyTorch reference)
        num = sp * (tm / pm) + st * (pm / tm) - 2.0 * spt
        out_ref[...] = num * lax.rsqrt(sp * st)


def _custom_loss_fn(output, targets):
    """JAX/Pallas equivalent of CustomLoss(grid_size, radius, sigma, pad_size)."""
    B = output.shape[0]
    P = PAD_SIZE
    out3 = output.reshape(B, -1, 3).astype(jnp.float32)
    tgt3 = targets.reshape(B, -1, 3).astype(jnp.float32)
    N = out3.shape[1]
    M = tgt3.shape[1]

    # Images per grid step: 256 lanes (G=8) for large batches on v6e/v7x,
    # 128 lanes (G=4) otherwise, whole batch if B is not a multiple of 4.
    if B % 8 == 0 and B >= 16:
        G = 8
    elif B % 4 == 0:
        G = 4
    else:
        G = B
    NG = B // G
    GP = G * P
    GM = G * M

    # --- per-seed tables: each per-(image,seed) scalar repeated across that
    #     image's 32 lanes (layout plumbing; compact (N,B) tables + in-kernel
    #     broadcast would remove the 32x read amplification for very large N).
    sx, sy, sph = out3[..., 0], out3[..., 1], out3[..., 2]
    scos = jnp.cos(2.0 * jnp.pi * sph)         # create_density_function, amp=1
    ssin = jnp.sin(2.0 * jnp.pi * sph)

    def lane_table(a):                          # (B, N) -> (N, B*P)
        return jnp.repeat(a.T, P, axis=1)

    SX, SY = lane_table(sx), lane_table(sy)
    SC, SS = lane_table(scos), lane_table(ssin)

    # --- per-target-point tables, grouped along a leading num_groups axis
    tx, ty, amp = tgt3[..., 0], tgt3[..., 1], tgt3[..., 2]
    txg = tx.reshape(NG, GM, 1)                                   # cols
    trow = jnp.stack([ty.reshape(NG, GM), amp.reshape(NG, GM)], axis=1)  # rows/amp

    # --- compile-time constants (numpy at trace time -> baked into executable)
    kk = (np.arange(P) - P // 2) % P            # output fftshift folded in
    nn = np.arange(P)
    ang = (-2.0 * np.pi / P) * np.outer(kk, nn)
    Fc, Fs = np.cos(ang), np.sin(ang)
    FL = np.block([[Fc, -Fs], [Fs, Fc]]).astype(np.float32)       # (2P, 2P)
    eyeG = np.eye(G)
    BDc = np.kron(eyeG, Fc.T)                                      # (GP, GP)
    BDs = np.kron(eyeG, Fs.T)
    Rr = np.block([[BDc, BDs], [-BDs, BDc]]).astype(np.float32)    # (2GP, 2GP)
    FL_bf = jnp.asarray(FL, dtype=jnp.bfloat16)
    R_bf = jnp.asarray(Rr, dtype=jnp.bfloat16)
    bmask = jnp.asarray((np.arange(GM)[:, None] // M ==
                         np.arange(GP)[None, :] // P).astype(np.float32))

    seed_spec = pl.BlockSpec((N, GP), lambda g: (0, g))
    loss = pl.pallas_call(
        _custom_loss_kernel,
        out_shape=jax.ShapeDtypeStruct((1, 1), jnp.float32),
        grid=(NG,),
        in_specs=[
            seed_spec, seed_spec, seed_spec, seed_spec,
            pl.BlockSpec((None, 2, GM), lambda g: (g, 0, 0)),     # [ty; amp]
            pl.BlockSpec((None, GM, 1), lambda g: (g, 0, 0)),     # tx
            pl.BlockSpec((GM, GP), lambda g: (0, 0)),             # block mask
            pl.BlockSpec((2 * P, 2 * P), lambda g: (0, 0)),       # FL (bf16)
            pl.BlockSpec((2 * GP, 2 * GP), lambda g: (0, 0)),     # R  (bf16)
        ],
        out_specs=pl.BlockSpec((1, 1), lambda g: (0, 0)),
        scratch_shapes=[pltpu.VMEM((1, 1), jnp.float32) for _ in range(5)],
        compiler_params=pltpu.CompilerParams(
            dimension_semantics=("arbitrary",)),   # sequential accumulator axis
    )(SX, SY, SC, SS, trow, txg, bmask, FL_bf, R_bf)
    return loss[0, 0]


custom_loss = jax.jit(_custom_loss_fn)


if __name__ == "__main__":
    key = jax.random.PRNGKey(0)
    B, N = 8, 8   # 8 images (two 4-image grid steps), 8 seeds / 8 target points
    k1, k2, k3, k4 = jax.random.split(key, 4)

    out_xy = jax.random.uniform(k1, (B, N, 2), minval=0.0,
                                maxval=float(GRID_SIZE - 1))
    out_ph = jax.random.uniform(k2, (B, N, 1), minval=-jnp.pi, maxval=jnp.pi)
    output = jnp.concatenate([out_xy, out_ph], axis=-1).reshape(B, N * 3)

    tgt_xy = jax.random.uniform(k3, (B, N, 2), minval=0.0,
                                maxval=float(2 * GRID_SIZE - 1))
    tgt_amp = jax.random.uniform(k4, (B, N, 1), minval=0.5, maxval=1.5)
    targets = jnp.concatenate([tgt_xy, tgt_amp], axis=-1).reshape(B, N * 3)

    loss = custom_loss(output, targets)
    jax.block_until_ready(loss)
    print("KERNEL_OK")
</pallas_src>

<mosaic_0001>
module attributes {stable_mosaic.version = 11 : i64} {
  func.func @_custom_loss_kernel(%arg0: i32, %arg1: memref<8x128xf32, #tpu.memory_space<vmem>>, %arg2: memref<8x128xf32, #tpu.memory_space<vmem>>, %arg3: memref<8x128xf32, #tpu.memory_space<vmem>>, %arg4: memref<8x128xf32, #tpu.memory_space<vmem>>, %arg5: memref<1x2x32xf32, #tpu.memory_space<vmem>>, %arg6: memref<1x32x1xf32, #tpu.memory_space<vmem>>, %arg7: memref<32x128xf32, #tpu.memory_space<vmem>>, %arg8: memref<64x64xbf16, #tpu.memory_space<vmem>>, %arg9: memref<256x256xbf16, #tpu.memory_space<vmem>>, %arg10: memref<1x1xf32, #tpu.memory_space<vmem>>, %arg11: memref<1x1xf32, #tpu.memory_space<vmem>>, %arg12: memref<1x1xf32, #tpu.memory_space<vmem>>, %arg13: memref<1x1xf32, #tpu.memory_space<vmem>>, %arg14: memref<1x1xf32, #tpu.memory_space<vmem>>, %arg15: memref<1x1xf32, #tpu.memory_space<vmem>>) attributes {dimension_semantics = [#tpu.dimension_semantics<arbitrary>], iteration_bounds = array<i64: 2>, scalar_prefetch = 0 : i64, scratch_operands = 5 : i64, tpu.core_type = #tpu.core_type<tc>, window_params = [{transform_indices = @transform_0, window_bounds = array<i64: 8, 128>}, {transform_indices = @transform_1, window_bounds = array<i64: 8, 128>}, {transform_indices = @transform_2, window_bounds = array<i64: 8, 128>}, {transform_indices = @transform_3, window_bounds = array<i64: 8, 128>}, {transform_indices = @transform_4, window_bounds = array<i64: 1, 2, 32>}, {transform_indices = @transform_5, window_bounds = array<i64: 1, 32, 1>}, {pipeline_mode = #tpu.pipeline_mode<synchronous>, transform_indices = @transform_6, window_bounds = array<i64: 32, 128>}, {pipeline_mode = #tpu.pipeline_mode<synchronous>, transform_indices = @transform_7, window_bounds = array<i64: 64, 64>}, {pipeline_mode = #tpu.pipeline_mode<synchronous>, transform_indices = @transform_8, window_bounds = array<i64: 256, 256>}, {pipeline_mode = #tpu.pipeline_mode<synchronous>, transform_indices = @transform_9, window_bounds = array<i64: 1, 1>}]} {
    %0 = tpu.iota {dimensions = array<i32: 0>} : vector<32x128xi32>
    %1 = tpu.iota {dimensions = array<i32: 1>} : vector<32x128xi32>
    %c31_i32 = arith.constant 31 : i32
    %2 = vector.broadcast %c31_i32 : i32 to vector<32x128xi32>
    %3 = arith.andi %1, %2 : vector<32x128xi32>
    %4 = arith.sitofp %0 : vector<32x128xi32> to vector<32x128xf32>
    %5 = arith.sitofp %3 : vector<32x128xi32> to vector<32x128xf32>
    %cst = arith.constant 8.000000e+00 : f32
    %6 = vector.broadcast %cst : f32 to vector<32x128xf32>
    %7 = arith.subf %4, %6 : vector<32x128xf32>
    %cst_0 = arith.constant 8.000000e+00 : f32
    %8 = vector.broadcast %cst_0 : f32 to vector<32x128xf32>
    %9 = arith.subf %5, %8 : vector<32x128xf32>
    %cst_1 = arith.constant -2.000000e+00 : f32
    %10 = vector.broadcast %cst_1 : f32 to vector<32x128xf32>
    %11 = arith.mulf %10, %7 : vector<32x128xf32>
    %cst_2 = arith.constant -2.000000e+00 : f32
    %12 = vector.broadcast %cst_2 : f32 to vector<32x128xf32>
    %13 = arith.mulf %12, %9 : vector<32x128xf32>
    %c8_i32 = arith.constant 8 : i32
    %14 = vector.broadcast %c8_i32 : i32 to vector<32x128xi32>
    %15 = arith.cmpi sge, %0, %14 : vector<32x128xi32>
    %c24_i32 = arith.constant 24 : i32
    %16 = vector.broadcast %c24_i32 : i32 to vector<32x128xi32>
    %17 = arith.cmpi slt, %0, %16 : vector<32x128xi32>
    %18 = arith.andi %15, %17 : vector<32x128xi1>
    %c8_i32_3 = arith.constant 8 : i32
    %19 = vector.broadcast %c8_i32_3 : i32 to vector<32x128xi32>
    %20 = arith.cmpi sge, %3, %19 : vector<32x128xi32>
    %21 = arith.andi %18, %20 : vector<32x128xi1>
    %c24_i32_4 = arith.constant 24 : i32
    %22 = vector.broadcast %c24_i32_4 : i32 to vector<32x128xi32>
    %23 = arith.cmpi slt, %3, %22 : vector<32x128xi32>
    %24 = arith.andi %21, %23 : vector<32x128xi1>
    %cst_5 = arith.constant 1.600000e+01 : f32
    %25 = vector.broadcast %cst_5 : f32 to vector<32x128xf32>
    %26 = arith.subf %4, %25 : vector<32x128xf32>
    %27 = arith.mulf %26, %26 : vector<32x128xf32>
    %cst_6 = arith.constant 1.600000e+01 : f32
    %28 = vector.broadcast %cst_6 : f32 to vector<32x128xf32>
    %29 = arith.subf %5, %28 : vector<32x128xf32>
    %30 = arith.mulf %29, %29 : vector<32x128xf32>
    %31 = arith.addf %27, %30 : vector<32x128xf32>
    %cst_7 = arith.constant 6.400000e+01 : f32
    %32 = vector.broadcast %cst_7 : f32 to vector<32x128xf32>
    %33 = arith.cmpf ole, %31, %32 : vector<32x128xf32>
    %34 = arith.andi %24, %33 : vector<32x128xi1>
    %cst_8 = arith.constant 6.400000e+01 : f32
    %35 = vector.broadcast %cst_8 : f32 to vector<32x128xf32>
    %36 = arith.cmpf ogt, %31, %35 : vector<32x128xf32>
    %c0 = arith.constant 0 : index
    %c0_9 = arith.constant 0 : index
    %37 = vector.load %arg1[%c0, %c0_9] : memref<8x128xf32, #tpu.memory_space<vmem>>, vector<1x128xf32>
    %c0_10 = arith.constant 0 : index
    %c0_11 = arith.constant 0 : index
    %38 = vector.load %arg2[%c0_10, %c0_11] : memref<8x128xf32, #tpu.memory_space<vmem>>, vector<1x128xf32>
    %c0_12 = arith.constant 0 : index
    %c0_13 = arith.constant 0 : index
    %39 = vector.load %arg3[%c0_12, %c0_13] : memref<8x128xf32, #tpu.memory_space<vmem>>, vector<1x128xf32>
    %c0_14 = arith.constant 0 : index
    %c0_15 = arith.constant 0 : index
    %40 = vector.load %arg4[%c0_14, %c0_15] : memref<8x128xf32, #tpu.memory_space<vmem>>, vector<1x128xf32>
    %41 = arith.mulf %37, %37 : vector<1x128xf32>
    %42 = arith.mulf %38, %38 : vector<1x128xf32>
    %43 = arith.addf %41, %42 : vector<1x128xf32>
    %44 = vector.broadcast %37 : vector<1x128xf32> to vector<32x128xf32>
    %45 = arith.mulf %11, %44 : vector<32x128xf32>
    %46 = vector.broadcast %38 : vector<1x128xf32> to vector<32x128xf32>
    %47 = arith.mulf %13, %46 : vector<32x128xf32>
    %48 = arith.addf %45, %47 : vector<32x128xf32>
    %49 = vector.broadcast %43 : vector<1x128xf32> to vector<32x128xf32>
    %50 = arith.addf %48, %49 : vector<32x128xf32>
    %51 = vector.shape_cast %39 : vector<1x128xf32> to vector<1x128xf32>
    %52 = vector.broadcast %51 : vector<1x128xf32> to vector<32x128xf32>
    %53 = vector.shape_cast %40 : vector<1x128xf32> to vector<1x128xf32>
    %54 = vector.broadcast %53 : vector<1x128xf32> to vector<32x128xf32>
    %c1_i32 = arith.constant 1 : i32
    %55 = arith.index_cast %c1_i32 : i32 to index
    %c0_16 = arith.constant 0 : index
    %56 = vector.load %arg1[%55, %c0_16] : memref<8x128xf32, #tpu.memory_space<vmem>>, vector<1x128xf32>
    %57 = arith.index_cast %c1_i32 : i32 to index
    %c0_17 = arith.constant 0 : index
    %58 = vector.load %arg2[%57, %c0_17] : memref<8x128xf32, #tpu.memory_space<vmem>>, vector<1x128xf32>
    %59 = arith.index_cast %c1_i32 : i32 to index
    %c0_18 = arith.constant 0 : index
    %60 = vector.load %arg3[%59, %c0_18] : memref<8x128xf32, #tpu.memory_space<vmem>>, vector<1x128xf32>
    %61 = arith.index_cast %c1_i32 : i32 to index
    %c0_19 = arith.constant 0 : index
    %62 = vector.load %arg4[%61, %c0_19] : memref<8x128xf32, #tpu.memory_space<vmem>>, vector<1x128xf32>
    %63 = arith.mulf %56, %56 : vector<1x128xf32>
    %64 = arith.mulf %58, %58 : vector<1x128xf32>
    %65 = arith.addf %63, %64 : vector<1x128xf32>
    %66 = vector.broadcast %56 : vector<1x128xf32> to vector<32x128xf32>
    %67 = arith.mulf %11, %66 : vector<32x128xf32>
    %68 = vector.broadcast %58 : vector<1x128xf32> to vector<32x128xf32>
    %69 = arith.mulf %13, %68 : vector<32x128xf32>
    %70 = arith.addf %67, %69 : vector<32x128xf32>
    %71 = vector.broadcast %65 : vector<1x128xf32> to vector<32x128xf32>
    %72 = arith.addf %70, %71 : vector<32x128xf32>
    %73 = arith.cmpf olt, %72, %50 : vector<32x128xf32>
    %74 = arith.select %73, %72, %50 : vector<32x128xi1>, vector<32x128xf32>
    %75 = vector.shape_cast %60 : vector<1x128xf32> to vector<1x128xf32>
    %76 = vector.broadcast %75 : vector<1x128xf32> to vector<32x128xf32>
    %77 = arith.select %73, %76, %52 : vector<32x128xi1>, vector<32x128xf32>
    %78 = vector.shape_cast %62 : vector<1x128xf32> to vector<1x128xf32>
    %79 = vector.broadcast %78 : vector<1x128xf32> to vector<32x128xf32>
    %80 = arith.select %73, %79, %54 : vector<32x128xi1>, vector<32x128xf32>
    %c2_i32 = arith.constant 2 : i32
    %81 = arith.index_cast %c2_i32 : i32 to index
    %c0_20 = arith.constant 0 : index
    %82 = vector.load %arg1[%81, %c0_20] : memref<8x128xf32, #tpu.memory_space<vmem>>, vector<1x128xf32>
    %83 = arith.index_cast %c2_i32 : i32 to index
    %c0_21 = arith.constant 0 : index
    %84 = vector.load %arg2[%83, %c0_21] : memref<8x128xf32, #tpu.memory_space<vmem>>, vector<1x128xf32>
    %85 = arith.index_cast %c2_i32 : i32 to index
    %c0_22 = arith.constant 0 : index
    %86 = vector.load %arg3[%85, %c0_22] : memref<8x128xf32, #tpu.memory_space<vmem>>, vector<1x128xf32>
    %87 = arith.index_cast %c2_i32 : i32 to index
    %c0_23 = arith.constant 0 : index
    %88 = vector.load %arg4[%87, %c0_23] : memref<8x128xf32, #tpu.memory_space<vmem>>, vector<1x128xf32>
    %89 = arith.mulf %82, %82 : vector<1x128xf32>
    %90 = arith.mulf %84, %84 : vector<1x128xf32>
    %91 = arith.addf %89, %90 : vector<1x128xf32>
    %92 = vector.broadcast %82 : vector<1x128xf32> to vector<32x128xf32>
    %93 = arith.mulf %11, %92 : vector<32x128xf32>
    %94 = vector.broadcast %84 : vector<1x128xf32> to vector<32x128xf32>
    %95 = arith.mulf %13, %94 : vector<32x128xf32>
    %96 = arith.addf %93, %95 : vector<32x128xf32>
    %97 = vector.broadcast %91 : vector<1x128xf32> to vector<32x128xf32>
    %98 = arith.addf %96, %97 : vector<32x128xf32>
    %99 = arith.cmpf olt, %98, %74 : vector<32x128xf32>
    %100 = arith.select %99, %98, %74 : vector<32x128xi1>, vector<32x128xf32>
    %101 = vector.shape_cast %86 : vector<1x128xf32> to vector<1x128xf32>
    %102 = vector.broadcast %101 : vector<1x128xf32> to vector<32x128xf32>
    %103 = arith.select %99, %102, %77 : vector<32x128xi1>, vector<32x128xf32>
    %104 = vector.shape_cast %88 : vector<1x128xf32> to vector<1x128xf32>
    %105 = vector.broadcast %104 : vector<1x128xf32> to vector<32x128xf32>
    %106 = arith.select %99, %105, %80 : vector<32x128xi1>, vector<32x128xf32>
    %c3_i32 = arith.constant 3 : i32
    %107 = arith.index_cast %c3_i32 : i32 to index
    %c0_24 = arith.constant 0 : index
    %108 = vector.load %arg1[%107, %c0_24] : memref<8x128xf32, #tpu.memory_space<vmem>>, vector<1x128xf32>
    %109 = arith.index_cast %c3_i32 : i32 to index
    %c0_25 = arith.constant 0 : index
    %110 = vector.load %arg2[%109, %c0_25] : memref<8x128xf32, #tpu.memory_space<vmem>>, vector<1x128xf32>
    %111 = arith.index_cast %c3_i32 : i32 to index
    %c0_26 = arith.constant 0 : index
    %112 = vector.load %arg3[%111, %c0_26] : memref<8x128xf32, #tpu.memory_space<vmem>>, vector<1x128xf32>
    %113 = arith.index_cast %c3_i32 : i32 to index
    %c0_27 = arith.constant 0 : index
    %114 = vector.load %arg4[%113, %c0_27] : memref<8x128xf32, #tpu.memory_space<vmem>>, vector<1x128xf32>
    %115 = arith.mulf %108, %108 : vector<1x128xf32>
    %116 = arith.mulf %110, %110 : vector<1x128xf32>
    %117 = arith.addf %115, %116 : vector<1x128xf32>
    %118 = vector.broadcast %108 : vector<1x128xf32> to vector<32x128xf32>
    %119 = arith.mulf %11, %118 : vector<32x128xf32>
    %120 = vector.broadcast %110 : vector<1x128xf32> to vector<32x128xf32>
    %121 = arith.mulf %13, %120 : vector<32x128xf32>
    %122 = arith.addf %119, %121 : vector<32x128xf32>
    %123 = vector.broadcast %117 : vector<1x128xf32> to vector<32x128xf32>
    %124 = arith.addf %122, %123 : vector<32x128xf32>
    %125 = arith.cmpf olt, %124, %100 : vector<32x128xf32>
    %126 = arith.select %125, %124, %100 : vector<32x128xi1>, vector<32x128xf32>
    %127 = vector.shape_cast %112 : vector<1x128xf32> to vector<1x128xf32>
    %128 = vector.broadcast %127 : vector<1x128xf32> to vector<32x128xf32>
    %129 = arith.select %125, %128, %103 : vector<32x128xi1>, vector<32x128xf32>
    %130 = vector.shape_cast %114 : vector<1x128xf32> to vector<1x128xf32>
    %131 = vector.broadcast %130 : vector<1x128xf32> to vector<32x128xf32>
    %132 = arith.select %125, %131, %106 : vector<32x128xi1>, vector<32x128xf32>
    %c4_i32 = arith.constant 4 : i32
    %133 = arith.index_cast %c4_i32 : i32 to index
    %c0_28 = arith.constant 0 : index
    %134 = vector.load %arg1[%133, %c0_28] : memref<8x128xf32, #tpu.memory_space<vmem>>, vector<1x128xf32>
    %135 = arith.index_cast %c4_i32 : i32 to index
    %c0_29 = arith.constant 0 : index
    %136 = vector.load %arg2[%135, %c0_29] : memref<8x128xf32, #tpu.memory_space<vmem>>, vector<1x128xf32>
    %137 = arith.index_cast %c4_i32 : i32 to index
    %c0_30 = arith.constant 0 : index
    %138 = vector.load %arg3[%137, %c0_30] : memref<8x128xf32, #tpu.memory_space<vmem>>, vector<1x128xf32>
    %139 = arith.index_cast %c4_i32 : i32 to index
    %c0_31 = arith.constant 0 : index
    %140 = vector.load %arg4[%139, %c0_31] : memref<8x128xf32, #tpu.memory_space<vmem>>, vector<1x128xf32>
    %141 = arith.mulf %134, %134 : vector<1x128xf32>
    %142 = arith.mulf %136, %136 : vector<1x128xf32>
    %143 = arith.addf %141, %142 : vector<1x128xf32>
    %144 = vector.broadcast %134 : vector<1x128xf32> to vector<32x128xf32>
    %145 = arith.mulf %11, %144 : vector<32x128xf32>
    %146 = vector.broadcast %136 : vector<1x128xf32> to vector<32x128xf32>
    %147 = arith.mulf %13, %146 : vector<32x128xf32>
    %148 = arith.addf %145, %147 : vector<32x128xf32>
    %149 = vector.broadcast %143 : vector<1x128xf32> to vector<32x128xf32>
    %150 = arith.addf %148, %149 : vector<32x128xf32>
    %151 = arith.cmpf olt, %150, %126 : vector<32x128xf32>
    %152 = arith.select %151, %150, %126 : vector<32x128xi1>, vector<32x128xf32>
    %153 = vector.shape_cast %138 : vector<1x128xf32> to vector<1x128xf32>
    %154 = vector.broadcast %153 : vector<1x128xf32> to vector<32x128xf32>
    %155 = arith.select %151, %154, %129 : vector<32x128xi1>, vector<32x128xf32>
    %156 = vector.shape_cast %140 : vector<1x128xf32> to vector<1x128xf32>
    %157 = vector.broadcast %156 : vector<1x128xf32> to vector<32x128xf32>
    %158 = arith.select %151, %157, %132 : vector<32x128xi1>, vector<32x128xf32>
    %c5_i32 = arith.constant 5 : i32
    %159 = arith.index_cast %c5_i32 : i32 to index
    %c0_32 = arith.constant 0 : index
    %160 = vector.load %arg1[%159, %c0_32] : memref<8x128xf32, #tpu.memory_space<vmem>>, vector<1x128xf32>
    %161 = arith.index_cast %c5_i32 : i32 to index
    %c0_33 = arith.constant 0 : index
    %162 = vector.load %arg2[%161, %c0_33] : memref<8x128xf32, #tpu.memory_space<vmem>>, vector<1x128xf32>
    %163 = arith.index_cast %c5_i32 : i32 to index
    %c0_34 = arith.constant 0 : index
    %164 = vector.load %arg3[%163, %c0_34] : memref<8x128xf32, #tpu.memory_space<vmem>>, vector<1x128xf32>
    %165 = arith.index_cast %c5_i32 : i32 to index
    %c0_35 = arith.constant 0 : index
    %166 = vector.load %arg4[%165, %c0_35] : memref<8x128xf32, #tpu.memory_space<vmem>>, vector<1x128xf32>
    %167 = arith.mulf %160, %160 : vector<1x128xf32>
    %168 = arith.mulf %162, %162 : vector<1x128xf32>
    %169 = arith.addf %167, %168 : vector<1x128xf32>
    %170 = vector.broadcast %160 : vector<1x128xf32> to vector<32x128xf32>
    %171 = arith.mulf %11, %170 : vector<32x128xf32>
    %172 = vector.broadcast %162 : vector<1x128xf32> to vector<32x128xf32>
    %173 = arith.mulf %13, %172 : vector<32x128xf32>
    %174 = arith.addf %171, %173 : vector<32x128xf32>
    %175 = vector.broadcast %169 : vector<1x128xf32> to vector<32x128xf32>
    %176 = arith.addf %174, %175 : vector<32x128xf32>
    %177 = arith.cmpf olt, %176, %152 : vector<32x128xf32>
    %178 = arith.select %177, %176, %152 : vector<32x128xi1>, vector<32x128xf32>
    %179 = vector.shape_cast %164 : vector<1x128xf32> to vector<1x128xf32>
    %180 = vector.broadcast %179 : vector<1x128xf32> to vector<32x128xf32>
    %181 = arith.select %177, %180, %155 : vector<32x128xi1>, vector<32x128xf32>
    %182 = vector.shape_cast %166 : vector<1x128xf32> to vector<1x128xf32>
    %183 = vector.broadcast %182 : vector<1x128xf32> to vector<32x128xf32>
    %184 = arith.select %177, %183, %158 : vector<32x128xi1>, vector<32x128xf32>
    %c6_i32 = arith.constant 6 : i32
    %185 = arith.index_cast %c6_i32 : i32 to index
    %c0_36 = arith.constant 0 : index
    %186 = vector.load %arg1[%185, %c0_36] : memref<8x128xf32, #tpu.memory_space<vmem>>, vector<1x128xf32>
    %187 = arith.index_cast %c6_i32 : i32 to index
    %c0_37 = arith.constant 0 : index
    %188 = vector.load %arg2[%187, %c0_37] : memref<8x128xf32, #tpu.memory_space<vmem>>, vector<1x128xf32>
    %189 = arith.index_cast %c6_i32 : i32 to index
    %c0_38 = arith.constant 0 : index
    %190 = vector.load %arg3[%189, %c0_38] : memref<8x128xf32, #tpu.memory_space<vmem>>, vector<1x128xf32>
    %191 = arith.index_cast %c6_i32 : i32 to index
    %c0_39 = arith.constant 0 : index
    %192 = vector.load %arg4[%191, %c0_39] : memref<8x128xf32, #tpu.memory_space<vmem>>, vector<1x128xf32>
    %193 = arith.mulf %186, %186 : vector<1x128xf32>
    %194 = arith.mulf %188, %188 : vector<1x128xf32>
    %195 = arith.addf %193, %194 : vector<1x128xf32>
    %196 = vector.broadcast %186 : vector<1x128xf32> to vector<32x128xf32>
    %197 = arith.mulf %11, %196 : vector<32x128xf32>
    %198 = vector.broadcast %188 : vector<1x128xf32> to vector<32x128xf32>
    %199 = arith.mulf %13, %198 : vector<32x128xf32>
    %200 = arith.addf %197, %199 : vector<32x128xf32>
    %201 = vector.broadcast %195 : vector<1x128xf32> to vector<32x128xf32>
    %202 = arith.addf %200, %201 : vector<32x128xf32>
    %203 = arith.cmpf olt, %202, %178 : vector<32x128xf32>
    %204 = arith.select %203, %202, %178 : vector<32x128xi1>, vector<32x128xf32>
    %205 = vector.shape_cast %190 : vector<1x128xf32> to vector<1x128xf32>
    %206 = vector.broadcast %205 : vector<1x128xf32> to vector<32x128xf32>
    %207 = arith.select %203, %206, %181 : vector<32x128xi1>, vector<32x128xf32>
    %208 = vector.shape_cast %192 : vector<1x128xf32> to vector<1x128xf32>
    %209 = vector.broadcast %208 : vector<1x128xf32> to vector<32x128xf32>
    %210 = arith.select %203, %209, %184 : vector<32x128xi1>, vector<32x128xf32>
    %c7_i32 = arith.constant 7 : i32
    %211 = arith.index_cast %c7_i32 : i32 to index
    %c0_40 = arith.constant 0 : index
    %212 = vector.load %arg1[%211, %c0_40] : memref<8x128xf32, #tpu.memory_space<vmem>>, vector<1x128xf32>
    %213 = arith.index_cast %c7_i32 : i32 to index
    %c0_41 = arith.constant 0 : index
    %214 = vector.load %arg2[%213, %c0_41] : memref<8x128xf32, #tpu.memory_space<vmem>>, vector<1x128xf32>
    %215 = arith.index_cast %c7_i32 : i32 to index
    %c0_42 = arith.constant 0 : index
    %216 = vector.load %arg3[%215, %c0_42] : memref<8x128xf32, #tpu.memory_space<vmem>>, vector<1x128xf32>
    %217 = arith.index_cast %c7_i32 : i32 to index
    %c0_43 = arith.constant 0 : index
    %218 = vector.load %arg4[%217, %c0_43] : memref<8x128xf32, #tpu.memory_space<vmem>>, vector<1x128xf32>
    %219 = arith.mulf %212, %212 : vector<1x128xf32>
    %220 = arith.mulf %214, %214 : vector<1x128xf32>
    %221 = arith.addf %219, %220 : vector<1x128xf32>
    %222 = vector.broadcast %212 : vector<1x128xf32> to vector<32x128xf32>
    %223 = arith.mulf %11, %222 : vector<32x128xf32>
    %224 = vector.broadcast %214 : vector<1x128xf32> to vector<32x128xf32>
    %225 = arith.mulf %13, %224 : vector<32x128xf32>
    %226 = arith.addf %223, %225 : vector<32x128xf32>
    %227 = vector.broadcast %221 : vector<1x128xf32> to vector<32x128xf32>
    %228 = arith.addf %226, %227 : vector<32x128xf32>
    %229 = arith.cmpf olt, %228, %204 : vector<32x128xf32>
    %230 = arith.select %229, %228, %204 : vector<32x128xi1>, vector<32x128xf32>
    %231 = vector.shape_cast %216 : vector<1x128xf32> to vector<1x128xf32>
    %232 = vector.broadcast %231 : vector<1x128xf32> to vector<32x128xf32>
    %233 = arith.select %229, %232, %207 : vector<32x128xi1>, vector<32x128xf32>
    %234 = vector.shape_cast %218 : vector<1x128xf32> to vector<1x128xf32>
    %235 = vector.broadcast %234 : vector<1x128xf32> to vector<32x128xf32>
    %236 = arith.select %229, %235, %210 : vector<32x128xi1>, vector<32x128xf32>
    %c7_i32_44 = arith.constant 7 : i32
    %237 = vector.shape_cast %39 : vector<1x128xf32> to vector<1x128xf32>
    %238 = vector.broadcast %237 : vector<1x128xf32> to vector<32x128xf32>
    %239 = arith.select %34, %233, %238 : vector<32x128xi1>, vector<32x128xf32>
    %240 = vector.shape_cast %40 : vector<1x128xf32> to vector<1x128xf32>
    %241 = vector.broadcast %240 : vector<1x128xf32> to vector<32x128xf32>
    %242 = arith.select %34, %236, %241 : vector<32x128xi1>, vector<32x128xf32>
    %cst_45 = arith.constant 1.000000e+00 : f32
    %243 = vector.broadcast %cst_45 : f32 to vector<32x128xf32>
    %244 = arith.select %36, %243, %239 : vector<32x128xi1>, vector<32x128xf32>
    %cst_46 = arith.constant 0.000000e+00 : f32
    %245 = vector.broadcast %cst_46 : f32 to vector<32x128xf32>
    %246 = arith.select %36, %245, %242 : vector<32x128xi1>, vector<32x128xf32>
    %247 = tpu.concatenate %244, %246 in 0 : vector<32x128xf32>, vector<32x128xf32> -> vector<64x128xf32>
    %248 = arith.truncf %247 : vector<64x128xf32> to vector<64x128xbf16>
    %c0_47 = arith.constant 0 : index
    %c0_48 = arith.constant 0 : index
    %249 = vector.load %arg8[%c0_47, %c0_48] : memref<64x64xbf16, #tpu.memory_space<vmem>>, vector<64x64xbf16>
    %cst_49 = arith.constant dense<0.000000e+00> : vector<64x128xf32>
    %250 = tpu.matmul %249, %248, %cst_49 {dimension_numbers = #tpu.dot_dimension_numbers<[1], [0], [0], [1], [0, 0, 1, 1], [], []>} : vector<64x64xbf16>, vector<64x128xbf16>, vector<64x128xf32> -> vector<64x128xf32>
    %251 = vector.extract_strided_slice %250 {offsets = [0, 0], sizes = [32, 128], strides = [1, 1]} : vector<64x128xf32> to vector<32x128xf32>
    %252 = vector.extract_strided_slice %250 {offsets = [32, 0], sizes = [32, 128], strides = [1, 1]} : vector<64x128xf32> to vector<32x128xf32>
    %253 = tpu.concatenate %251, %252 in 1 : vector<32x128xf32>, vector<32x128xf32> -> vector<32x256xf32>
    %254 = arith.truncf %253 : vector<32x256xf32> to vector<32x256xbf16>
    %c0_50 = arith.constant 0 : index
    %c0_51 = arith.constant 0 : index
    %255 = vector.load %arg9[%c0_50, %c0_51] : memref<256x256xbf16, #tpu.memory_space<vmem>>, vector<256x256xbf16>
    %cst_52 = arith.constant dense<0.000000e+00> : vector<32x256xf32>
    %256 = tpu.matmul %254, %255, %cst_52 {dimension_numbers = #tpu.dot_dimension_numbers<[1], [0], [0], [1], [0, 0, 1, 1], [], []>} : vector<32x256xbf16>, vector<256x256xbf16>, vector<32x256xf32> -> vector<32x256xf32>
    %257 = vector.extract_strided_slice %256 {offsets = [0, 0], sizes = [32, 128], strides = [1, 1]} : vector<32x256xf32> to vector<32x128xf32>
    %258 = vector.extract_strided_slice %256 {offsets = [0, 128], sizes = [32, 128], strides = [1, 1]} : vector<32x256xf32> to vector<32x128xf32>
    %259 = arith.mulf %257, %257 : vector<32x128xf32>
    %260 = arith.mulf %258, %258 : vector<32x128xf32>
    %261 = arith.addf %259, %260 : vector<32x128xf32>
    %262 = math.sqrt %261 : vector<32x128xf32>
    %c0_53 = arith.constant 0 : index
    %c0_54 = arith.constant 0 : index
    %c0_55 = arith.constant 0 : index
    %263 = vector.load %arg5[%c0_53, %c0_54, %c0_55] : memref<1x2x32xf32, #tpu.memory_space<vmem>>, vector<1x1x32xf32>
    %264 = vector.shape_cast %263 : vector<1x1x32xf32> to vector<1x32xf32>
    %c0_56 = arith.constant 0 : index
    %c1 = arith.constant 1 : index
    %c0_57 = arith.constant 0 : index
    %265 = vector.load %arg5[%c0_56, %c1, %c0_57] : memref<1x2x32xf32, #tpu.memory_space<vmem>>, vector<1x1x32xf32>
    %266 = vector.shape_cast %265 : vector<1x1x32xf32> to vector<1x32xf32>
    %267 = tpu.iota {dimensions = array<i32: 0>} : vector<32x32xi32>
    %268 = arith.sitofp %267 : vector<32x32xi32> to vector<32x32xf32>
    %269 = vector.broadcast %264 : vector<1x32xf32> to vector<32x32xf32>
    %270 = arith.subf %268, %269 : vector<32x32xf32>
    %271 = arith.mulf %270, %270 : vector<32x32xf32>
    %cst_58 = arith.constant 0.000000e+00 : f32
    %272 = vector.broadcast %cst_58 : f32 to vector<32x32xf32>
    %273 = arith.subf %272, %271 : vector<32x32xf32>
    %cst_59 = arith.constant 0.222222224 : f32
    %274 = vector.broadcast %cst_59 : f32 to vector<32x32xf32>
    %275 = arith.mulf %273, %274 : vector<32x32xf32>
    %276 = math.exp %275 : vector<32x32xf32>
    %277 = vector.broadcast %266 : vector<1x32xf32> to vector<32x32xf32>
    %278 = arith.mulf %277, %276 : vector<32x32xf32>
    %c0_60 = arith.constant 0 : index
    %c0_61 = arith.constant 0 : index
    %c0_62 = arith.constant 0 : index
    %279 = vector.load %arg6[%c0_60, %c0_61, %c0_62] : memref<1x32x1xf32, #tpu.memory_space<vmem>>, vector<1x32x1xf32>
    %280 = vector.shape_cast %279 : vector<1x32x1xf32> to vector<32x1xf32>
    %281 = tpu.iota {dimensions = array<i32: 1>} : vector<32x128xi32>
    %c31_i32_63 = arith.constant 31 : i32
    %282 = vector.broadcast %c31_i32_63 : i32 to vector<32x128xi32>
    %283 = arith.andi %281, %282 : vector<32x128xi32>
    %284 = arith.sitofp %283 : vector<32x128xi32> to vector<32x128xf32>
    %c0_64 = arith.constant 0 : index
    %c0_65 = arith.constant 0 : index
    %285 = vector.load %arg7[%c0_64, %c0_65] : memref<32x128xf32, #tpu.memory_space<vmem>>, vector<32x128xf32>
    %286 = vector.broadcast %280 : vector<32x1xf32> to vector<32x128xf32>
    %287 = arith.subf %284, %286 : vector<32x128xf32>
    %288 = arith.mulf %287, %287 : vector<32x128xf32>
    %cst_66 = arith.constant 0.000000e+00 : f32
    %289 = vector.broadcast %cst_66 : f32 to vector<32x128xf32>
    %290 = arith.subf %289, %288 : vector<32x128xf32>
    %cst_67 = arith.constant 0.222222224 : f32
    %291 = vector.broadcast %cst_67 : f32 to vector<32x128xf32>
    %292 = arith.mulf %290, %291 : vector<32x128xf32>
    %293 = math.exp %292 : vector<32x128xf32>
    %294 = arith.mulf %285, %293 : vector<32x128xf32>
    %cst_68 = arith.constant dense<0.000000e+00> : vector<32x128xf32>
    %295 = tpu.matmul %278, %294, %cst_68 {dimension_numbers = #tpu.dot_dimension_numbers<[1], [0], [0], [1], [0, 0, 1, 1], [], []>} : vector<32x32xf32>, vector<32x128xf32>, vector<32x128xf32> -> vector<32x128xf32>
    %c0_i32 = arith.constant 0 : i32
    %296 = arith.cmpi eq, %arg0, %c0_i32 : i32
    %297 = arith.extui %296 : i1 to i32
    %c0_i32_69 = arith.constant 0 : i32
    %298 = arith.cmpi ne, %297, %c0_i32_69 : i32
    scf.if %298 {
      %cst_97 = arith.constant 0.000000e+00 : f32
      %345 = vector.broadcast %cst_97 : f32 to vector<1x1xf32>
      %c0_98 = arith.constant 0 : index
      %c0_99 = arith.constant 0 : index
      %346 = vector.load %arg11[%c0_98, %c0_99] : memref<1x1xf32, #tpu.memory_space<vmem>>, vector<1x1xf32>
      tpu.vector_store %arg11[%c0_98, %c0_99], %345 {strides = array<i32>} : memref<1x1xf32, #tpu.memory_space<vmem>>, vector<1x1xf32>,
      %cst_100 = arith.constant 0.000000e+00 : f32
      %347 = vector.broadcast %cst_100 : f32 to vector<1x1xf32>
      %c0_101 = arith.constant 0 : index
      %c0_102 = arith.constant 0 : index
      %348 = vector.load %arg12[%c0_101, %c0_102] : memref<1x1xf32, #tpu.memory_space<vmem>>, vector<1x1xf32>
      tpu.vector_store %arg12[%c0_101, %c0_102], %347 {strides = array<i32>} : memref<1x1xf32, #tpu.memory_space<vmem>>, vector<1x1xf32>,
      %cst_103 = arith.constant 0.000000e+00 : f32
      %349 = vector.broadcast %cst_103 : f32 to vector<1x1xf32>
      %c0_104 = arith.constant 0 : index
      %c0_105 = arith.constant 0 : index
      %350 = vector.load %arg13[%c0_104, %c0_105] : memref<1x1xf32, #tpu.memory_space<vmem>>, vector<1x1xf32>
      tpu.vector_store %arg13[%c0_104, %c0_105], %349 {strides = array<i32>} : memref<1x1xf32, #tpu.memory_space<vmem>>, vector<1x1xf32>,
      %cst_106 = arith.constant 0.000000e+00 : f32
      %351 = vector.broadcast %cst_106 : f32 to vector<1x1xf32>
      %c0_107 = arith.constant 0 : index
      %c0_108 = arith.constant 0 : index
      %352 = vector.load %arg14[%c0_107, %c0_108] : memref<1x1xf32, #tpu.memory_space<vmem>>, vector<1x1xf32>
      tpu.vector_store %arg14[%c0_107, %c0_108], %351 {strides = array<i32>} : memref<1x1xf32, #tpu.memory_space<vmem>>, vector<1x1xf32>,
      %cst_109 = arith.constant 0.000000e+00 : f32
      %353 = vector.broadcast %cst_109 : f32 to vector<1x1xf32>
      %c0_110 = arith.constant 0 : index
      %c0_111 = arith.constant 0 : index
      %354 = vector.load %arg15[%c0_110, %c0_111] : memref<1x1xf32, #tpu.memory_space<vmem>>, vector<1x1xf32>
      tpu.vector_store %arg15[%c0_110, %c0_111], %353 {strides = array<i32>} : memref<1x1xf32, #tpu.memory_space<vmem>>, vector<1x1xf32>,
    } else {
    }
    %c0_70 = arith.constant 0 : index
    %c0_71 = arith.constant 0 : index
    %299 = vector.load %arg11[%c0_70, %c0_71] : memref<1x1xf32, #tpu.memory_space<vmem>>, vector<1x1xf32>
    %300 = vector.shape_cast %262 : vector<32x128xf32> to vector<1x32x128xf32>
    %cst_72 = arith.constant dense<0xFF800000> : vector<1xf32>
    %301 = vector.multi_reduction <maximumf>, %300, %cst_72 [1, 2] : vector<1x32x128xf32> to vector<1xf32>
    %302 = vector.shape_cast %301 : vector<1xf32> to vector<1x1x1xf32>
    %303 = vector.extract %302[0, 0, 0] : f32 from vector<1x1x1xf32>
    %304 = vector.broadcast %303 : f32 to vector<1x1xf32>
    %305 = arith.maximumf %299, %304 : vector<1x1xf32>
    %c0_73 = arith.constant 0 : index
    %c0_74 = arith.constant 0 : index
    %306 = vector.load %arg11[%c0_73, %c0_74] : memref<1x1xf32, #tpu.memory_space<vmem>>, vector<1x1xf32>
    tpu.vector_store %arg11[%c0_73, %c0_74], %305 {strides = array<i32>} : memref<1x1xf32, #tpu.memory_space<vmem>>, vector<1x1xf32>,
    %c0_75 = arith.constant 0 : index
    %c0_76 = arith.constant 0 : index
    %307 = vector.load %arg12[%c0_75, %c0_76] : memref<1x1xf32, #tpu.memory_space<vmem>>, vector<1x1xf32>
    %308 = vector.shape_cast %295 : vector<32x128xf32> to vector<1x32x128xf32>
    %cst_77 = arith.constant dense<0xFF800000> : vector<1xf32>
    %309 = vector.multi_reduction <maximumf>, %308, %cst_77 [1, 2] : vector<1x32x128xf32> to vector<1xf32>
    %310 = vector.shape_cast %309 : vector<1xf32> to vector<1x1x1xf32>
    %311 = vector.extract %310[0, 0, 0] : f32 from vector<1x1x1xf32>
    %312 = vector.broadcast %311 : f32 to vector<1x1xf32>
    %313 = arith.maximumf %307, %312 : vector<1x1xf32>
    %c0_78 = arith.constant 0 : index
    %c0_79 = arith.constant 0 : index
    %314 = vector.load %arg12[%c0_78, %c0_79] : memref<1x1xf32, #tpu.memory_space<vmem>>, vector<1x1xf32>
    tpu.vector_store %arg12[%c0_78, %c0_79], %313 {strides = array<i32>} : memref<1x1xf32, #tpu.memory_space<vmem>>, vector<1x1xf32>,
    %c0_80 = arith.constant 0 : index
    %c0_81 = arith.constant 0 : index
    %315 = vector.load %arg13[%c0_80, %c0_81] : memref<1x1xf32, #tpu.memory_space<vmem>>, vector<1x1xf32>
    %316 = arith.mulf %262, %262 : vector<32x128xf32>
    %317 = vector.shape_cast %316 : vector<32x128xf32> to vector<1x32x128xf32>
    %cst_82 = arith.constant dense<0.000000e+00> : vector<1xf32>
    %318 = vector.multi_reduction <add>, %317, %cst_82 [1, 2] : vector<1x32x128xf32> to vector<1xf32>
    %319 = vector.shape_cast %318 : vector<1xf32> to vector<1x1x1xf32>
    %320 = vector.extract %319[0, 0, 0] : f32 from vector<1x1x1xf32>
    %321 = vector.broadcast %320 : f32 to vector<1x1xf32>
    %322 = arith.addf %315, %321 : vector<1x1xf32>
    %c0_83 = arith.constant 0 : index
    %c0_84 = arith.constant 0 : index
    %323 = vector.load %arg13[%c0_83, %c0_84] : memref<1x1xf32, #tpu.memory_space<vmem>>, vector<1x1xf32>
    tpu.vector_store %arg13[%c0_83, %c0_84], %322 {strides = array<i32>} : memref<1x1xf32, #tpu.memory_space<vmem>>, vector<1x1xf32>,
    %c0_85 = arith.constant 0 : index
    %c0_86 = arith.constant 0 : index
    %324 = vector.load %arg14[%c0_85, %c0_86] : memref<1x1xf32, #tpu.memory_space<vmem>>, vector<1x1xf32>
    %325 = arith.mulf %295, %295 : vector<32x128xf32>
    %326 = vector.shape_cast %325 : vector<32x128xf32> to vector<1x32x128xf32>
    %cst_87 = arith.constant dense<0.000000e+00> : vector<1xf32>
    %327 = vector.multi_reduction <add>, %326, %cst_87 [1, 2] : vector<1x32x128xf32> to vector<1xf32>
    %328 = vector.shape_cast %327 : vector<1xf32> to vector<1x1x1xf32>
    %329 = vector.extract %328[0, 0, 0] : f32 from vector<1x1x1xf32>
    %330 = vector.broadcast %329 : f32 to vector<1x1xf32>
    %331 = arith.addf %324, %330 : vector<1x1xf32>
    %c0_88 = arith.constant 0 : index
    %c0_89 = arith.constant 0 : index
    %332 = vector.load %arg14[%c0_88, %c0_89] : memref<1x1xf32, #tpu.memory_space<vmem>>, vector<1x1xf32>
    tpu.vector_store %arg14[%c0_88, %c0_89], %331 {strides = array<i32>} : memref<1x1xf32, #tpu.memory_space<vmem>>, vector<1x1xf32>,
    %c0_90 = arith.constant 0 : index
    %c0_91 = arith.constant 0 : index
    %333 = vector.load %arg15[%c0_90, %c0_91] : memref<1x1xf32, #tpu.memory_space<vmem>>, vector<1x1xf32>
    %334 = arith.mulf %262, %295 : vector<32x128xf32>
    %335 = vector.shape_cast %334 : vector<32x128xf32> to vector<1x32x128xf32>
    %cst_92 = arith.constant dense<0.000000e+00> : vector<1xf32>
    %336 = vector.multi_reduction <add>, %335, %cst_92 [1, 2] : vector<1x32x128xf32> to vector<1xf32>
    %337 = vector.shape_cast %336 : vector<1xf32> to vector<1x1x1xf32>
    %338 = vector.extract %337[0, 0, 0] : f32 from vector<1x1x1xf32>
    %339 = vector.broadcast %338 : f32 to vector<1x1xf32>
    %340 = arith.addf %333, %339 : vector<1x1xf32>
    %c0_93 = arith.constant 0 : index
    %c0_94 = arith.constant 0 : index
    %341 = vector.load %arg15[%c0_93, %c0_94] : memref<1x1xf32, #tpu.memory_space<vmem>>, vector<1x1xf32>
    tpu.vector_store %arg15[%c0_93, %c0_94], %340 {strides = array<i32>} : memref<1x1xf32, #tpu.memory_space<vmem>>, vector<1x1xf32>,
    %c1_i32_95 = arith.constant 1 : i32
    %342 = arith.cmpi eq, %arg0, %c1_i32_95 : i32
    %343 = arith.extui %342 : i1 to i32
    %c0_i32_96 = arith.constant 0 : i32
    %344 = arith.cmpi ne, %343, %c0_i32_96 : i32
    scf.if %344 {
      %c0_97 = arith.constant 0 : index
      %c0_98 = arith.constant 0 : index
      %345 = vector.load %arg13[%c0_97, %c0_98] : memref<1x1xf32, #tpu.memory_space<vmem>>, vector<1x1xf32>
      %c0_99 = arith.constant 0 : index
      %c0_100 = arith.constant 0 : index
      %346 = vector.load %arg14[%c0_99, %c0_100] : memref<1x1xf32, #tpu.memory_space<vmem>>, vector<1x1xf32>
      %c0_101 = arith.constant 0 : index
      %c0_102 = arith.constant 0 : index
      %347 = vector.load %arg15[%c0_101, %c0_102] : memref<1x1xf32, #tpu.memory_space<vmem>>, vector<1x1xf32>
      %c0_103 = arith.constant 0 : index
      %c0_104 = arith.constant 0 : index
      %348 = vector.load %arg11[%c0_103, %c0_104] : memref<1x1xf32, #tpu.memory_space<vmem>>, vector<1x1xf32>
      %c0_105 = arith.constant 0 : index
      %c0_106 = arith.constant 0 : index
      %349 = vector.load %arg12[%c0_105, %c0_106] : memref<1x1xf32, #tpu.memory_space<vmem>>, vector<1x1xf32>
      %350 = arith.divf %349, %348 : vector<1x1xf32>
      %351 = arith.mulf %345, %350 : vector<1x1xf32>
      %352 = arith.divf %348, %349 : vector<1x1xf32>
      %353 = arith.mulf %346, %352 : vector<1x1xf32>
      %354 = arith.addf %351, %353 : vector<1x1xf32>
      %cst_107 = arith.constant 2.000000e+00 : f32
      %355 = vector.broadcast %cst_107 : f32 to vector<1x1xf32>
      %356 = arith.mulf %355, %347 : vector<1x1xf32>
      %357 = arith.subf %354, %356 : vector<1x1xf32>
      %358 = arith.mulf %345, %346 : vector<1x1xf32>
      %359 = math.rsqrt %358 : vector<1x1xf32>
      %360 = arith.mulf %357, %359 : vector<1x1xf32>
      %c0_108 = arith.constant 0 : index
      %c0_109 = arith.constant 0 : index
      %361 = vector.load %arg10[%c0_108, %c0_109] : memref<1x1xf32, #tpu.memory_space<vmem>>, vector<1x1xf32>
      tpu.vector_store %arg10[%c0_108, %c0_109], %360 {strides = array<i32>} : memref<1x1xf32, #tpu.memory_space<vmem>>, vector<1x1xf32>,
    } else {
    }
    return
  }
  func.func @transform_0(%arg0: i32) -> (i32, i32) {
    %c0_i32 = arith.constant 0 : i32
    %c0_i32_0 = arith.constant 0 : i32
    return %c0_i32, %arg0 : i32, i32
  }
  func.func @transform_1(%arg0: i32) -> (i32, i32) {
    %c0_i32 = arith.constant 0 : i32
    %c0_i32_0 = arith.constant 0 : i32
    return %c0_i32, %arg0 : i32, i32
  }
  func.func @transform_2(%arg0: i32) -> (i32, i32) {
    %c0_i32 = arith.constant 0 : i32
    %c0_i32_0 = arith.constant 0 : i32
    return %c0_i32, %arg0 : i32, i32
  }
  func.func @transform_3(%arg0: i32) -> (i32, i32) {
    %c0_i32 = arith.constant 0 : i32
    %c0_i32_0 = arith.constant 0 : i32
    return %c0_i32, %arg0 : i32, i32
  }
  func.func @transform_4(%arg0: i32) -> (i32, i32, i32) {
    %c0_i32 = arith.constant 0 : i32
    %c0_i32_0 = arith.constant 0 : i32
    %c0_i32_1 = arith.constant 0 : i32
    return %arg0, %c0_i32, %c0_i32_0 : i32, i32, i32
  }
  func.func @transform_5(%arg0: i32) -> (i32, i32, i32) {
    %c0_i32 = arith.constant 0 : i32
    %c0_i32_0 = arith.constant 0 : i32
    %c0_i32_1 = arith.constant 0 : i32
    return %arg0, %c0_i32, %c0_i32_0 : i32, i32, i32
  }
  func.func @transform_6(%arg0: i32) -> (i32, i32) {
    %c0_i32 = arith.constant 0 : i32
    %c0_i32_0 = arith.constant 0 : i32
    %c0_i32_1 = arith.constant 0 : i32
    return %c0_i32, %c0_i32_0 : i32, i32
  }
  func.func @transform_7(%arg0: i32) -> (i32, i32) {
    %c0_i32 = arith.constant 0 : i32
    %c0_i32_0 = arith.constant 0 : i32
    %c0_i32_1 = arith.constant 0 : i32
    return %c0_i32, %c0_i32_0 : i32, i32
  }
  func.func @transform_8(%arg0: i32) -> (i32, i32) {
    %c0_i32 = arith.constant 0 : i32
    %c0_i32_0 = arith.constant 0 : i32
    %c0_i32_1 = arith.constant 0 : i32
    return %c0_i32, %c0_i32_0 : i32, i32
  }
  func.func @transform_9(%arg0: i32) -> (i32, i32) {
    %c0_i32 = arith.constant 0 : i32
    %c0_i32_0 = arith.constant 0 : i32
    %c0_i32_1 = arith.constant 0 : i32
    return %c0_i32, %c0_i32_0 : i32, i32
  }
}

</mosaic_0001>

<llo_original>
// kernel: squeeze.12
$region0: #{squeeze.12}
  %s0 = inlined_call_operand.vmem [shape: f32[8,8,1], index: 0, kind: input, shape index: {}]
  %s1 = inlined_call_operand.vmem [shape: f32[2,1,32], index: 1, kind: output, shape index: {}]
  $region1: #{squeeze.12} parent=0
    #allocation0 [shape = 'u8[4096]{0}', space=vmem, size = 0x1000, scoped, tag = 'scoped mem for output reshape']
    %s2 = smov 3
    %v3 = vld [vmem:[%s0] ss:$4 sm:%s2]
    %vm4 = vcmask 64512
    %5 = vst.msk [vmem:[#allocation0] sm:$0x3] %vm4, %v3
    %s6 = scalar_lea.vmem %s0, 3
    %s7 = smov 3
    %v8 = vld [vmem:[%s6] ss:$4 sm:%s7]
    %9 = vrot.lane.b32.xlu0 %v8, 24
    %v10 = vpop.permute.xlu0 %9
    %vm11 = vcmask 261312
    %12 = vst.msk [vmem:[#allocation0] sm:$0x3] %vm11, %v10
    %s13 = scalar_lea.vmem %s0, 2
    %s14 = smov 3
    %v15 = vld [vmem:[%s13] ss:$4 sm:%s14]
    %16 = vrot.lane.b32.xlu0 %v15, 16
    %v17 = vpop.permute.xlu0 %16
    %vm18 = vcmask 195712
    %19 = vst.msk [vmem:[#allocation0] sm:$0x3] %vm18, %v17
    %s20 = scalar_lea.vmem %s0, 1
    %s21 = smov 3
    %v22 = vld [vmem:[%s20] ss:$4 sm:%s21]
    %23 = vrot.lane.b32.xlu0 %v22, 8
    %v24 = vpop.permute.xlu0 %23
    %vm25 = vcmask 130112
    %26 = vst.msk [vmem:[#allocation0] sm:$0x3] %vm25, %v24
    %s28 = sshllo.u32 0, 2
    %v30 = vld [vmem:[#allocation0] sm:%s28]
    %s31 = sshllo.u32 0, 2
    %32 = vst [vmem:[%s1] sm:%s31] %v30

// kernel: squeeze.0
$region0: #{squeeze.0}
  %s0 = inlined_call_operand.vmem [shape: f32[8,8,1], index: 0, kind: input, shape index: {}]
  %s1 = inlined_call_operand.vmem [shape: f32[2,32,1], index: 1, kind: output, shape index: {}]
  %v2 = vld [vmem:[%s0] sm:$0xff]
  %vm3 = vcmask 7168
  %4 = vst.msk [vmem:[%s1] ss:$8 sm:$0xf] %vm3, %v2
  %5 = vst.msk [vmem:[%s1] ss:$8 sm:$0xf0] %vm3, %v2
  %v6 = vld [vmem:[%s0] sm:$0xff]
  %7 = vrot.lane.b32.xlu0 %v6, 127
  %v8 = vpop.permute.xlu0 %7
  %vm9 = vcmask 7168
  %s10 = scalar_lea.vmem %s1, 1
  %11 = vst.msk [vmem:[%s10] ss:$8 sm:$0xf] %vm9, %v8
  %s12 = scalar_lea.vmem %s1, 1
  %13 = vst.msk [vmem:[%s12] ss:$8 sm:$0xf0] %vm9, %v8
  %v14 = vld [vmem:[%s0] sm:$0xff]
  %15 = vrot.lane.b32.xlu0 %v14, 126
  %v16 = vpop.permute.xlu0 %15
  %vm17 = vcmask 7168
  %s18 = scalar_lea.vmem %s1, 2
  %19 = vst.msk [vmem:[%s18] ss:$8 sm:$0xf] %vm17, %v16
  %s20 = scalar_lea.vmem %s1, 2
  %21 = vst.msk [vmem:[%s20] ss:$8 sm:$0xf0] %vm17, %v16
  %v22 = vld [vmem:[%s0] sm:$0xff]
  %23 = vrot.lane.b32.xlu0 %v22, 125
  %v24 = vpop.permute.xlu0 %23
  %vm25 = vcmask 7168
  %s26 = scalar_lea.vmem %s1, 3
  %27 = vst.msk [vmem:[%s26] ss:$8 sm:$0xf] %vm25, %v24
  %s28 = scalar_lea.vmem %s1, 3
  %29 = vst.msk [vmem:[%s28] ss:$8 sm:$0xf0] %vm25, %v24
  %v30 = vld [vmem:[%s0] sm:$0xff]
  %31 = vrot.lane.b32.xlu0 %v30, 124
  %v32 = vpop.permute.xlu0 %31
  %vm33 = vcmask 7168
  %s34 = scalar_lea.vmem %s1, 4
  %35 = vst.msk [vmem:[%s34] ss:$8 sm:$0xf] %vm33, %v32
  %s36 = scalar_lea.vmem %s1, 4
  %37 = vst.msk [vmem:[%s36] ss:$8 sm:$0xf0] %vm33, %v32
  %v38 = vld [vmem:[%s0] sm:$0xff]
  %39 = vrot.lane.b32.xlu0 %v38, 123
  %v40 = vpop.permute.xlu0 %39
  %vm41 = vcmask 7168
  %s42 = scalar_lea.vmem %s1, 5
  %43 = vst.msk [vmem:[%s42] ss:$8 sm:$0xf] %vm41, %v40
  %s44 = scalar_lea.vmem %s1, 5
  %45 = vst.msk [vmem:[%s44] ss:$8 sm:$0xf0] %vm41, %v40
  %v46 = vld [vmem:[%s0] sm:$0xff]
  %47 = vrot.lane.b32.xlu0 %v46, 122
  %v48 = vpop.permute.xlu0 %47
  %vm49 = vcmask 7168
  %s50 = scalar_lea.vmem %s1, 6
  %51 = vst.msk [vmem:[%s50] ss:$8 sm:$0xf] %vm49, %v48
  %s52 = scalar_lea.vmem %s1, 6
  %53 = vst.msk [vmem:[%s52] ss:$8 sm:$0xf0] %vm49, %v48
  %v54 = vld [vmem:[%s0] sm:$0xff]
  %55 = vrot.lane.b32.xlu0 %v54, 121
  %v56 = vpop.permute.xlu0 %55
  %vm57 = vcmask 7168
  %s58 = scalar_lea.vmem %s1, 7
  %59 = vst.msk [vmem:[%s58] ss:$8 sm:$0xf] %vm57, %v56
  %s60 = scalar_lea.vmem %s1, 7
  %61 = vst.msk [vmem:[%s60] ss:$8 sm:$0xf0] %vm57, %v56

// kernel: _custom_loss_fn.1
$region0: #{_custom_loss_fn.1}
  #allocation0 [shape = 'u32[]', space=smem, size = 0x4, offset = 0x4, fixed_abs, tag = 'smem constant byte address 0x4 - core index']
  #allocation1 [shape = 'u32[144,128]{1,0:T(1,128)}', space=vmem, size = 0x12000, scoped, tag = 'internal scratch']
  #allocation2 [shape = 'f32[1,1]{1,0:T(1,128)}', space=vmem, size = 0x200, scoped, tag = 'scratch operand']
  #allocation3 [shape = 'f32[1,1]{1,0:T(1,128)}', space=vmem, size = 0x200, scoped, tag = 'scratch operand']
  #allocation4 [shape = 'f32[1,1]{1,0:T(1,128)}', space=vmem, size = 0x200, scoped, tag = 'scratch operand']
  #allocation5 [shape = 'f32[1,1]{1,0:T(1,128)}', space=vmem, size = 0x200, scoped, tag = 'scratch operand']
  #allocation6 [shape = 'f32[1,1]{1,0:T(1,128)}', space=vmem, size = 0x200, scoped, tag = 'scratch operand']
  %s0 = inlined_call_operand.vmem [shape: f32[8,256], index: 0, kind: input, shape index: {}]
  %s1 = inlined_call_operand.vmem [shape: f32[8,256], index: 1, kind: input, shape index: {}]
  %s2 = inlined_call_operand.vmem [shape: f32[8,256], index: 2, kind: input, shape index: {}]
  %s3 = inlined_call_operand.vmem [shape: f32[8,256], index: 3, kind: input, shape index: {}]
  %s4 = inlined_call_operand.vmem [shape: f32[2,2,32], index: 4, kind: input, shape index: {}]
  %s5 = inlined_call_operand.vmem [shape: f32[2,32,1], index: 5, kind: input, shape index: {}]
  %s6 = inlined_call_operand.vmem [shape: f32[32,128], index: 6, kind: input, shape index: {}]
  %s7 = inlined_call_operand.vmem [shape: bf16[64,64], index: 7, kind: input, shape index: {}]
  %s8 = inlined_call_operand.vmem [shape: bf16[256,256], index: 8, kind: input, shape index: {}]
  %s9 = inlined_call_operand.hbm [shape: f32[1,1], index: 9, kind: output, shape index: {}]
  %s10 = sld [smem:[#allocation0]]
  $region77: #{_custom_loss_fn.1} parent=0
    _
  %s12 = ssub.s32 1, %s10
  %s13 = scalar_select 0, %s12, %s10
  $region1: #{_custom_loss_fn.1} parent=0
    #allocation7 [shape = 'u8[512]{0}', space=vmem, size = 0x400, scoped, tag = 'output window, operand 0, single buffered']
    #allocation8 [shape = 's32[2]{0}', space=sflag, size = 0x8, scoped, tag = 'scoped memory for _custom_loss_fn.1']
    %14 = vsyncpa [#allocation8], 0
    loop: start=0, step=1, limit=4
    $region2: #{_custom_loss_fn.1} parent=1 // loop_pre_header
      _
    $region3: #{_custom_loss_fn.1} parent=1 // loop_header
      %s16 = sphi 0, %s20
      %p17 = scmp.ge.s32.totalorder %s16, 4
      %s26 = sphi 0, %s28
      %s29 = sphi 0, %s26
      %s30 = sphi 0, %s29
      %s46 = sphi 0, %s30
      %s52 = sphi 0, %s54
      %s55 = sphi 0, %s52
      %s56 = sphi 0, %s55
      %s72 = sphi 0, %s56
      %s78 = sphi 0, %s80
      %s81 = sphi 0, %s78
      %s82 = sphi 0, %s81
      %s98 = sphi 0, %s82
      %s104 = sphi 0, %s106
      %s107 = sphi 0, %s104
      %s108 = sphi 0, %s107
      %s124 = sphi 0, %s108
      %s130 = sphi 0, %s132
      %s133 = sphi 0, %s130
      %s134 = sphi 0, %s133
      %s150 = sphi 0, %s134
      %s156 = sphi 0, %s158
      %s159 = sphi 0, %s156
      %s160 = sphi 0, %s159
      %s176 = sphi 0, %s160
      %s180 = sphi 0, %s180
      %s182 = sphi 0, %s180
      %s183 = sphi 0, %s182
      %s197 = sphi 0, %s183
      %s201 = sphi 0, %s201
      %s203 = sphi 0, %s201
      %s204 = sphi 0, %s203
      %s218 = sphi 0, %s204
      %s222 = sphi 0, %s222
      %s224 = sphi 0, %s222
      %s225 = sphi 0, %s224
      %s239 = sphi 0, %s225
      %s243 = sphi 0, %s243
      %s245 = sphi 0, %s243
      %s246 = sphi 0, %s245
      %s260 = sphi 0, %s246
    $region4: #{_custom_loss_fn.1} parent=1 // loop_header_branch
      %19 = sbr.rel (%p17) target = $region8
    $region5: #{_custom_loss_fn.1} parent=1 // loop_body
      %s21 = ssub.s32 %s16, 1
      %s22 = ssub.s32 %s16, 2
      %s23 = sadd.s32 %s16, 1
      %s24 = ssub.s32 %s16, %s23
      %p25 = scmp.eq.s32.totalorder %s24, 0
      %s27 = sadd.s32 %s26, 1
      %s28 = scalar_select %p25, %s26, %s27
      %p31 = pneg %p25
      %p32 = scmp.eq.s32.totalorder %s16, 1
      %p33 = por %p31, %p32
      %p34 = scmp.ne.s32.totalorder %s26, %s29
      %p35 = scmp.eq.s32.totalorder %s16, 0
      %p36 = por %p34, %p35
      %p37 = scmp.ne.s32.totalorder %s26, %s29
      %p38 = scmp.eq.s32.totalorder %s21, 1
      %p39 = por %p37, %p38
      %p40 = scmp.ne.s32.totalorder %s29, %s30
      %p41 = scmp.eq.s32.totalorder %s21, 0
      %p42 = por %p40, %p41
      %p43 = scmp.ne.s32.totalorder %s29, %s30
      %p44 = scmp.eq.s32.totalorder %s22, 1
      %p45 = por %p43, %p44
      %p47 = scmp.ne.s32.totalorder %s30, %s46
      %p48 = scmp.eq.s32.totalorder %s22, 0
      %p49 = por %p47, %p48
      %s50 = ssub.s32 %s16, %s23
      %p51 = scmp.eq.s32.totalorder %s50, 0
      %s53 = sadd.s32 %s52, 1
      %s54 = scalar_select %p51, %s52, %s53
      %p57 = pneg %p51
      %p58 = scmp.eq.s32.totalorder %s16, 1
      %p59 = por %p57, %p58
      %p60 = scmp.ne.s32.totalorder %s52, %s55
      %p61 = scmp.eq.s32.totalorder %s16, 0
      %p62 = por %p60, %p61
      %p63 = scmp.ne.s32.totalorder %s52, %s55
      %p64 = scmp.eq.s32.totalorder %s21, 1
      %p65 = por %p63, %p64
      %p66 = scmp.ne.s32.totalorder %s55, %s56
      %p67 = scmp.eq.s32.totalorder %s21, 0
      %p68 = por %p66, %p67
      %p69 = scmp.ne.s32.totalorder %s55, %s56
      %p70 = scmp.eq.s32.totalorder %s22, 1
      %p71 = por %p69, %p70
      %p73 = scmp.ne.s32.totalorder %s56, %s72
      %p74 = scmp.eq.s32.totalorder %s22, 0
      %p75 = por %p73, %p74
      %s76 = ssub.s32 %s16, %s23
      %p77 = scmp.eq.s32.totalorder %s76, 0
      %s79 = sadd.s32 %s78, 1
      %s80 = scalar_select %p77, %s78, %s79
      %p83 = pneg %p77
      %p84 = scmp.eq.s32.totalorder %s16, 1
      %p85 = por %p83, %p84
      %p86 = scmp.ne.s32.totalorder %s78, %s81
      %p87 = scmp.eq.s32.totalorder %s16, 0
      %p88 = por %p86, %p87
      %p89 = scmp.ne.s32.totalorder %s78, %s81
      %p90 = scmp.eq.s32.totalorder %s21, 1
      %p91 = por %p89, %p90
      %p92 = scmp.ne.s32.totalorder %s81, %s82
      %p93 = scmp.eq.s32.totalorder %s21, 0
      %p94 = por %p92, %p93
      %p95 = scmp.ne.s32.totalorder %s81, %s82
      %p96 = scmp.eq.s32.totalorder %s22, 1
      %p97 = por %p95, %p96
      %p99 = scmp.ne.s32.totalorder %s82, %s98
      %p100 = scmp.eq.s32.totalorder %s22, 0
      %p101 = por %p99, %p100
      %s102 = ssub.s32 %s16, %s23
      %p103 = scmp.eq.s32.totalorder %s102, 0
      %s105 = sadd.s32 %s104, 1
      %s106 = scalar_select %p103, %s104, %s105
      %p109 = pneg %p103
      %p110 = scmp.eq.s32.totalorder %s16, 1
      %p111 = por %p109, %p110
      %p112 = scmp.ne.s32.totalorder %s104, %s107
      %p113 = scmp.eq.s32.totalorder %s16, 0
      %p114 = por %p112, %p113
      %p115 = scmp.ne.s32.totalorder %s104, %s107
      %p116 = scmp.eq.s32.totalorder %s21, 1
      %p117 = por %p115, %p116
      %p118 = scmp.ne.s32.totalorder %s107, %s108
      %p119 = scmp.eq.s32.totalorder %s21, 0
      %p120 = por %p118, %p119
      %p121 = scmp.ne.s32.totalorder %s107, %s108
      %p122 = scmp.eq.s32.totalorder %s22, 1
      %p123 = por %p121, %p122
      %p125 = scmp.ne.s32.totalorder %s108, %s124
      %p126 = scmp.eq.s32.totalorder %s22, 0
      %p127 = por %p125, %p126
      %s128 = ssub.s32 %s16, %s23
      %p129 = scmp.eq.s32.totalorder %s128, 0
      %s131 = sadd.s32 %s130, 1
      %s132 = scalar_select %p129, %s130, %s131
      %p135 = pneg %p129
      %p136 = scmp.eq.s32.totalorder %s16, 1
      %p137 = por %p135, %p136
      %p138 = scmp.ne.s32.totalorder %s130, %s133
      %p139 = scmp.eq.s32.totalorder %s16, 0
      %p140 = por %p138, %p139
      %p141 = scmp.ne.s32.totalorder %s130, %s133
      %p142 = scmp.eq.s32.totalorder %s21, 1
      %p143 = por %p141, %p142
      %p144 = scmp.ne.s32.totalorder %s133, %s134
      %p145 = scmp.eq.s32.totalorder %s21, 0
      %p146 = por %p144, %p145
      %p147 = scmp.ne.s32.totalorder %s133, %s134
      %p148 = scmp.eq.s32.totalorder %s22, 1
      %p149 = por %p147, %p148
      %p151 = scmp.ne.s32.totalorder %s134, %s150
      %p152 = scmp.eq.s32.totalorder %s22, 0
      %p153 = por %p151, %p152
      %s154 = ssub.s32 %s16, %s23
      %p155 = scmp.eq.s32.totalorder %s154, 0
      %s157 = sadd.s32 %s156, 1
      %s158 = scalar_select %p155, %s156, %s157
      %p161 = pneg %p155
      %p162 = scmp.eq.s32.totalorder %s16, 1
      %p163 = por %p161, %p162
      %p164 = scmp.ne.s32.totalorder %s156, %s159
      %p165 = scmp.eq.s32.totalorder %s16, 0
      %p166 = por %p164, %p165
      %p167 = scmp.ne.s32.totalorder %s156, %s159
      %p168 = scmp.eq.s32.totalorder %s21, 1
      %p169 = por %p167, %p168
      %p170 = scmp.ne.s32.totalorder %s159, %s160
      %p171 = scmp.eq.s32.totalorder %s21, 0
      %p172 = por %p170, %p171
      %p173 = scmp.ne.s32.totalorder %s159, %s160
      %p174 = scmp.eq.s32.totalorder %s22, 1
      %p175 = por %p173, %p174
      %p177 = scmp.ne.s32.totalorder %s160, %s176
      %p178 = scmp.eq.s32.totalorder %s22, 0
      %p179 = por %p177, %p178
      %s181 = sadd.s32 %s180, 1
      %p184 = scmp.eq.s32.totalorder %s16, 1
      %p185 = scmp.ne.s32.totalorder %s180, %s182
      %p186 = scmp.eq.s32.totalorder %s16, 0
      %p187 = por %p185, %p186
      %p188 = scmp.ne.s32.totalorder %s180, %s182
      %p189 = scmp.eq.s32.totalorder %s21, 1
      %p190 = por %p188, %p189
      %p191 = scmp.ne.s32.totalorder %s182, %s183
      %p192 = scmp.eq.s32.totalorder %s21, 0
      %p193 = por %p191, %p192
      %p194 = scmp.ne.s32.totalorder %s182, %s183
      %p195 = scmp.eq.s32.totalorder %s22, 1
      %p196 = por %p194, %p195
      %p198 = scmp.ne.s32.totalorder %s183, %s197
      %p199 = scmp.eq.s32.totalorder %s22, 0
      %p200 = por %p198, %p199
      %s202 = sadd.s32 %s201, 1
      %p205 = scmp.eq.s32.totalorder %s16, 1
      %p206 = scmp.ne.s32.totalorder %s201, %s203
      %p207 = scmp.eq.s32.totalorder %s16, 0
      %p208 = por %p206, %p207
      %p209 = scmp.ne.s32.totalorder %s201, %s203
      %p210 = scmp.eq.s32.totalorder %s21, 1
      %p211 = por %p209, %p210
      %p212 = scmp.ne.s32.totalorder %s203, %s204
      %p213 = scmp.eq.s32.totalorder %s21, 0
      %p214 = por %p212, %p213
      %p215 = scmp.ne.s32.totalorder %s203, %s204
      %p216 = scmp.eq.s32.totalorder %s22, 1
      %p217 = por %p215, %p216
      %p219 = scmp.ne.s32.totalorder %s204, %s218
      %p220 = scmp.eq.s32.totalorder %s22, 0
      %p221 = por %p219, %p220
      %s223 = sadd.s32 %s222, 1
      %p226 = scmp.eq.s32.totalorder %s16, 1
      %p227 = scmp.ne.s32.totalorder %s222, %s224
      %p228 = scmp.eq.s32.totalorder %s16, 0
      %p229 = por %p227, %p228
      %p230 = scmp.ne.s32.totalorder %s222, %s224
      %p231 = scmp.eq.s32.totalorder %s21, 1
      %p232 = por %p230, %p231
      %p233 = scmp.ne.s32.totalorder %s224, %s225
      %p234 = scmp.eq.s32.totalorder %s21, 0
      %p235 = por %p233, %p234
      %p236 = scmp.ne.s32.totalorder %s224, %s225
      %p237 = scmp.eq.s32.totalorder %s22, 1
      %p238 = por %p236, %p237
      %p240 = scmp.ne.s32.totalorder %s225, %s239
      %p241 = scmp.eq.s32.totalorder %s22, 0
      %p242 = por %p240, %p241
      %s244 = sadd.s32 %s243, 1
      %p247 = scmp.eq.s32.totalorder %s16, 1
      %p248 = scmp.ne.s32.totalorder %s243, %s245
      %p249 = scmp.eq.s32.totalorder %s16, 0
      %p250 = por %p248, %p249
      %p251 = scmp.ne.s32.totalorder %s243, %s245
      %p252 = scmp.eq.s32.totalorder %s21, 1
      %p253 = por %p251, %p252
      %p254 = scmp.ne.s32.totalorder %s245, %s246
      %p255 = scmp.eq.s32.totalorder %s21, 0
      %p256 = por %p254, %p255
      %p257 = scmp.ne.s32.totalorder %s245, %s246
      %p258 = scmp.eq.s32.totalorder %s22, 1
      %p259 = por %p257, %p258
      %p261 = scmp.ne.s32.totalorder %s246, %s260
      %p262 = scmp.eq.s32.totalorder %s22, 0
      %p263 = por %p261, %p262
      %p264 = scmp.le.s32.totalorder 1, %s16
      %p265 = scmp.lt.s32.totalorder %s16, 3
      %p266 = pnand %p264, %p265
      %p267 = pneg %p266
      // Predicated region
      $region9: #{_custom_loss_fn.1} parent=5 // pred_check
        _
      $region10: #{_custom_loss_fn.1} parent=5 // pred_check_branch
        %269 = sbr.rel (%p266) target = $region12
      $region11: #{_custom_loss_fn.1} parent=5 // pred_region
        %s270 = ssub.s32 %s16, 1
        // Predicated region
        $region13: #{_custom_loss_fn.1} parent=11 // pred_check
          %p271 = pneg %p193
        $region14: #{_custom_loss_fn.1} parent=11 // pred_check_branch
          %273 = sbr.rel (%p271) target = $region16
        $region15: #{_custom_loss_fn.1} parent=11 // pred_region
          _
        $region16: #{_custom_loss_fn.1} parent=11 // pred_fallthru
          _
        // Predicated region
        $region17: #{_custom_loss_fn.1} parent=11 // pred_check
          %p274 = pneg %p214
        $region18: #{_custom_loss_fn.1} parent=11 // pred_check_branch
          %276 = sbr.rel (%p274) target = $region20
        $region19: #{_custom_loss_fn.1} parent=11 // pred_region
          _
        $region20: #{_custom_loss_fn.1} parent=11 // pred_fallthru
          _
        // Predicated region
        $region21: #{_custom_loss_fn.1} parent=11 // pred_check
          %p277 = pneg %p235
        $region22: #{_custom_loss_fn.1} parent=11 // pred_check_branch
          %279 = sbr.rel (%p277) target = $region24
        $region23: #{_custom_loss_fn.1} parent=11 // pred_region
          _
        $region24: #{_custom_loss_fn.1} parent=11 // pred_fallthru
          _
      $region12: #{_custom_loss_fn.1} parent=5 // pred_fallthru
        _
      %p280 = scmp.lt.s32.totalorder %s16, 2
      // Predicated region
      $region25: #{_custom_loss_fn.1} parent=5 // pred_check
        %p281 = pneg %p280
      $region26: #{_custom_loss_fn.1} parent=5 // pred_check_branch
        %283 = sbr.rel (%p281) target = $region28
      $region27: #{_custom_loss_fn.1} parent=5 // pred_region
        // Predicated region
        $region29: #{_custom_loss_fn.1} parent=27 // pred_check
          %p284 = pneg %p36
        $region30: #{_custom_loss_fn.1} parent=27 // pred_check_branch
          %286 = sbr.rel (%p284) target = $region32
        $region31: #{_custom_loss_fn.1} parent=27 // pred_region
          %p287 = scmp.lt.s32.totalorder %s16, 1
          %s288 = scalar_select %p287, %s16, 1
          %s289 = smul.addr %s288, 8
          %s290 = scalar_lea.vmem %s0, %s289
        $region32: #{_custom_loss_fn.1} parent=27 // pred_fallthru
          _
        // Predicated region
        $region33: #{_custom_loss_fn.1} parent=27 // pred_check
          %p291 = pneg %p62
        $region34: #{_custom_loss_fn.1} parent=27 // pred_check_branch
          %293 = sbr.rel (%p291) target = $region36
        $region35: #{_custom_loss_fn.1} parent=27 // pred_region
          %p294 = scmp.lt.s32.totalorder %s16, 1
          %s295 = scalar_select %p294, %s16, 1
          %s296 = smul.addr %s295, 8
          %s297 = scalar_lea.vmem %s1, %s296
        $region36: #{_custom_loss_fn.1} parent=27 // pred_fallthru
          _
        // Predicated region
        $region37: #{_custom_loss_fn.1} parent=27 // pred_check
          %p298 = pneg %p88
        $region38: #{_custom_loss_fn.1} parent=27 // pred_check_branch
          %300 = sbr.rel (%p298) target = $region40
        $region39: #{_custom_loss_fn.1} parent=27 // pred_region
          %p301 = scmp.lt.s32.totalorder %s16, 1
          %s302 = scalar_select %p301, %s16, 1
          %s303 = smul.addr %s302, 8
          %s304 = scalar_lea.vmem %s2, %s303
        $region40: #{_custom_loss_fn.1} parent=27 // pred_fallthru
          _
        // Predicated region
        $region41: #{_custom_loss_fn.1} parent=27 // pred_check
          %p305 = pneg %p114
        $region42: #{_custom_loss_fn.1} parent=27 // pred_check_branch
          %307 = sbr.rel (%p305) target = $region44
        $region43: #{_custom_loss_fn.1} parent=27 // pred_region
          %p308 = scmp.lt.s32.totalorder %s16, 1
          %s309 = scalar_select %p308, %s16, 1
          %s310 = smul.addr %s309, 8
          %s311 = scalar_lea.vmem %s3, %s310
        $region44: #{_custom_loss_fn.1} parent=27 // pred_fallthru
          _
        // Predicated region
        $region45: #{_custom_loss_fn.1} parent=27 // pred_check
          %p312 = pneg %p140
        $region46: #{_custom_loss_fn.1} parent=27 // pred_check_branch
          %314 = sbr.rel (%p312) target = $region48
        $region47: #{_custom_loss_fn.1} parent=27 // pred_region
          %p315 = scmp.lt.s32.totalorder %s16, 1
          %s316 = scalar_select %p315, %s16, 1
          %s317 = smul.addr %s316, 2
          %s318 = scalar_lea.vmem %s4, %s317
        $region48: #{_custom_loss_fn.1} parent=27 // pred_fallthru
          _
        // Predicated region
        $region49: #{_custom_loss_fn.1} parent=27 // pred_check
          %p319 = pneg %p166
        $region50: #{_custom_loss_fn.1} parent=27 // pred_check_branch
          %321 = sbr.rel (%p319) target = $region52
        $region51: #{_custom_loss_fn.1} parent=27 // pred_region
          %p322 = scmp.lt.s32.totalorder %s16, 1
          %s323 = scalar_select %p322, %s16, 1
          %s324 = smul.addr %s323, 4
          %s325 = smul.addr %s324, 8
          %s326 = scalar_lea.vmem %s5, %s325
        $region52: #{_custom_loss_fn.1} parent=27 // pred_fallthru
          _
      $region28: #{_custom_loss_fn.1} parent=5 // pred_fallthru
        _
      %p327 = scmp.le.s32.totalorder 1, %s16
      %p328 = scmp.lt.s32.totalorder %s16, 3
      %p329 = pnand %p327, %p328
      %p330 = pneg %p329
      // Predicated region
      $region53: #{_custom_loss_fn.1} parent=5 // pred_check
        _
      $region54: #{_custom_loss_fn.1} parent=5 // pred_check_branch
        %332 = sbr.rel (%p329) target = $region56
      $region55: #{_custom_loss_fn.1} parent=5 // pred_region
        %s333 = ssub.s32 %s16, 1
        %p334 = scmp.lt.s32.totalorder %s21, 1
        %s335 = scalar_select %p334, %s21, 1
        %s336 = smul.addr %s335, 8
        %s337 = scalar_lea.vmem %s0, %s336
        %p338 = pneg %p42
        %p339 = pneg %p39
        %p340 = scmp.lt.s32.totalorder %s21, 1
        %s341 = scalar_select %p340, %s21, 1
        %s342 = smul.addr %s341, 8
        %s343 = scalar_lea.vmem %s1, %s342
        %p344 = pneg %p68
        %p345 = pneg %p65
        %p346 = scmp.lt.s32.totalorder %s21, 1
        %s347 = scalar_select %p346, %s21, 1
        %s348 = smul.addr %s347, 8
        %s349 = scalar_lea.vmem %s2, %s348
        %p350 = pneg %p94
        %p351 = pneg %p91
        %p352 = scmp.lt.s32.totalorder %s21, 1
        %s353 = scalar_select %p352, %s21, 1
        %s354 = smul.addr %s353, 8
        %s355 = scalar_lea.vmem %s3, %s354
        %p356 = pneg %p120
        %p357 = pneg %p117
        %p358 = scmp.lt.s32.totalorder %s21, 1
        %s359 = scalar_select %p358, %s21, 1
        %s360 = smul.addr %s359, 2
        %s361 = scalar_lea.vmem %s4, %s360
        %p362 = pneg %p146
        %p363 = pneg %p143
        %p364 = scmp.lt.s32.totalorder %s21, 1
        %s365 = scalar_select %p364, %s21, 1
        %s366 = smul.addr %s365, 4
        %s367 = smul.addr %s366, 8
        %s368 = scalar_lea.vmem %s5, %s367
        %p369 = pneg %p172
        %p370 = pneg %p169
        %p371 = pneg %p193
        %p372 = pneg %p190
        %p373 = pneg %p214
        %p374 = pneg %p211
        %p375 = pneg %p235
        %p376 = pneg %p232
        %p377 = pneg %p256
        %p378 = pneg %p253
        %p379 = scmp.lt.s32.totalorder %s21, 1
        %s380 = scalar_select %p379, %s21, 1
        %s381 = smul.addr %s380, 8
        %s382 = scalar_lea.vmem %s0, %s381
        %p383 = scmp.lt.s32.totalorder %s21, 1
        %s384 = scalar_select %p383, %s21, 1
        %s385 = smul.addr %s384, 8
        %s386 = scalar_lea.vmem %s1, %s385
        %p387 = scmp.lt.s32.totalorder %s21, 1
        %s388 = scalar_select %p387, %s21, 1
        %s389 = smul.addr %s388, 8
        %s390 = scalar_lea.vmem %s2, %s389
        %p391 = scmp.lt.s32.totalorder %s21, 1
        %s392 = scalar_select %p391, %s21, 1
        %s393 = smul.addr %s392, 8
        %s394 = scalar_lea.vmem %s3, %s393
        %p395 = scmp.lt.s32.totalorder %s21, 1
        %s396 = scalar_select %p395, %s21, 1
        %s397 = smul.addr %s396, 2
        %s398 = scalar_lea.vmem %s4, %s397
        %p399 = scmp.lt.s32.totalorder %s21, 1
        %s400 = scalar_select %p399, %s21, 1
        %s401 = smul.addr %s400, 4
        %s402 = smul.addr %s401, 8
        %s403 = scalar_lea.vmem %s5, %s402
        %v405 = vlaneseq
        %v406 = vshrl.u32 %v405, 7
        %v407 = vadd.s32 %v406, 8
        %v408 = vadd.s32 %v406, 16
        %v409 = vadd.s32 %v406, 24
        %v410 = vlaneseq
        %v411 = vand.u32 %v410, 127
        %v412 = vand.u32 %v411, 31
        %v413 = vcvt.s32.f32 %v406
        %v414 = vcvt.s32.f32 %v407
        %v415 = vcvt.s32.f32 %v408
        %v416 = vcvt.s32.f32 %v409
        %v417 = vcvt.s32.f32 %v412
        %v418 = vsub.f32 %v413, 8.0
        %v419 = vsub.f32 %v414, 8.0
        %v420 = vsub.f32 %v415, 8.0
        %v421 = vsub.f32 %v416, 8.0
        %v422 = vsub.f32 %v417, 8.0
        %v423 = vmul.f32 %v418, -2.0
        %v424 = vmul.f32 %v419, -2.0
        %v425 = vmul.f32 %v420, -2.0
        %v426 = vmul.f32 %v421, -2.0
        %v427 = vmul.f32 %v422, -2.0
        %vm428 = vcmp.ge.s32.totalorder %v406, 8
        %vm429 = vcmp.ge.s32.totalorder %v407, 8
        %vm430 = vcmp.ge.s32.totalorder %v408, 8
        %vm431 = vcmp.ge.s32.totalorder %v409, 8
        %vm432 = vcmp.lt.s32.totalorder %v406, 24
        %vm433 = vcmp.lt.s32.totalorder %v407, 24
        %vm434 = vcmp.lt.s32.totalorder %v408, 24
        %vm435 = vcmp.lt.s32.totalorder %v409, 24
        %vm436 = vmand %vm428, %vm432
        %vm437 = vmand %vm429, %vm433
        %vm438 = vmand %vm430, %vm434
        %vm439 = vmand %vm431, %vm435
        %vm440 = vcmp.ge.s32.totalorder %v412, 8
        %vm441 = vmand %vm436, %vm440
        %vm442 = vmand %vm437, %vm440
        %vm443 = vmand %vm438, %vm440
        %vm444 = vmand %vm439, %vm440
        %vm445 = vcmp.lt.s32.totalorder %v412, 24
        %vm446 = vmand %vm441, %vm445
        %vm447 = vmand %vm442, %vm445
        %vm448 = vmand %vm443, %vm445
        %vm449 = vmand %vm444, %vm445
        %v450 = vsub.f32 %v413, 16.0
        %v451 = vsub.f32 %v414, 16.0
        %v452 = vsub.f32 %v415, 16.0
        %v453 = vsub.f32 %v416, 16.0
        %v454 = vmul.f32 %v450, %v450
        %v455 = vmul.f32 %v451, %v451
        %v456 = vmul.f32 %v452, %v452
        %v457 = vmul.f32 %v453, %v453
        %v458 = vsub.f32 %v417, 16.0
        %v459 = vmul.f32 %v458, %v458
        %v460 = vadd.f32 %v454, %v459
        %v461 = vadd.f32 %v455, %v459
        %v462 = vadd.f32 %v456, %v459
        %v463 = vadd.f32 %v457, %v459
        %vm464 = vcmp.le.f32.partialorder %v460, 64.0
        %vm465 = vcmp.le.f32.partialorder %v461, 64.0
        %vm466 = vcmp.le.f32.partialorder %v462, 64.0
        %vm467 = vcmp.le.f32.partialorder %v463, 64.0
        %vm468 = vmand %vm446, %vm464
        %vm469 = vmand %vm447, %vm465
        %vm470 = vmand %vm448, %vm466
        %vm471 = vmand %vm449, %vm467
        %vm472 = vcmp.gt.f32.partialorder %v460, 64.0
        %vm473 = vcmp.gt.f32.partialorder %v461, 64.0
        %vm474 = vcmp.gt.f32.partialorder %v462, 64.0
        %vm475 = vcmp.gt.f32.partialorder %v463, 64.0
        %v476 = vld [vmem:[%s382] sm:$0x1]
        %v477 = vld [vmem:[%s386] sm:$0x1]
        %v478 = vld [vmem:[%s390] sm:$0x1]
        %v479 = vld [vmem:[%s394] sm:$0x1]
        %v480 = vmul.f32 %v476, %v476
        %v481 = vmul.f32 %v477, %v477
        %v482 = vadd.f32 %v480, %v481
        %v483 = vlaneseq
        %v484 = vshrl.u32 %v483, 7
        %v485 = vsub.s32 0, %v484
        %v486 = vrot.slane %v476, %v485
        %v487 = vmul.f32 %v423, %v486
        %v488 = vmul.f32 %v424, %v486
        %v489 = vmul.f32 %v425, %v486
        %v490 = vmul.f32 %v426, %v486
        %v491 = vlaneseq
        %v492 = vshrl.u32 %v491, 7
        %v493 = vsub.s32 0, %v492
        %v494 = vrot.slane %v477, %v493
        %v495 = vmul.f32 %v427, %v494
        %v496 = vadd.f32 %v487, %v495
        %v497 = vadd.f32 %v488, %v495
        %v498 = vadd.f32 %v489, %v495
        %v499 = vadd.f32 %v490, %v495
        %v500 = vlaneseq
        %v501 = vshrl.u32 %v500, 7
        %v502 = vsub.s32 0, %v501
        %v503 = vrot.slane %v482, %v502
        %v504 = vadd.f32 %v496, %v503
        %v505 = vadd.f32 %v497, %v503
        %v506 = vadd.f32 %v498, %v503
        %v507 = vadd.f32 %v499, %v503
        %v508 = vlaneseq
        %v509 = vshrl.u32 %v508, 7
        %v510 = vsub.s32 0, %v509
        %v511 = vrot.slane %v478, %v510
        %v512 = vlaneseq
        %v513 = vshrl.u32 %v512, 7
        %v514 = vsub.s32 0, %v513
        %v515 = vrot.slane %v479, %v514
        %v516 = vld [vmem:[%s382 + $0x1] sm:$0x1]
        %v517 = vld [vmem:[%s386 + $0x1] sm:$0x1]
        %v518 = vld [vmem:[%s390 + $0x1] sm:$0x1]
        %v519 = vld [vmem:[%s394 + $0x1] sm:$0x1]
        %v520 = vmul.f32 %v516, %v516
        %v521 = vmul.f32 %v517, %v517
        %v522 = vadd.f32 %v520, %v521
        %v523 = vlaneseq
        %v524 = vshrl.u32 %v523, 7
        %v525 = vsub.s32 0, %v524
        %v526 = vrot.slane %v516, %v525
        %v527 = vmul.f32 %v423, %v526
        %v528 = vmul.f32 %v424, %v526
        %v529 = vmul.f32 %v425, %v526
        %v530 = vmul.f32 %v426, %v526
        %v531 = vlaneseq
        %v532 = vshrl.u32 %v531, 7
        %v533 = vsub.s32 0, %v532
        %v534 = vrot.slane %v517, %v533
        %v535 = vmul.f32 %v427, %v534
        %v536 = vadd.f32 %v527, %v535
        %v537 = vadd.f32 %v528, %v535
        %v538 = vadd.f32 %v529, %v535
        %v539 = vadd.f32 %v530, %v535
        %v540 = vlaneseq
        %v541 = vshrl.u32 %v540, 7
        %v542 = vsub.s32 0, %v541
        %v543 = vrot.slane %v522, %v542
        %v544 = vadd.f32 %v536, %v543
        %v545 = vadd.f32 %v537, %v543
        %v546 = vadd.f32 %v538, %v543
        %v547 = vadd.f32 %v539, %v543
        %vm548 = vcmp.lt.f32.partialorder %v544, %v504
        %vm549 = vcmp.lt.f32.partialorder %v545, %v505
        %vm550 = vcmp.lt.f32.partialorder %v546, %v506
        %vm551 = vcmp.lt.f32.partialorder %v547, %v507
        %v552 = vsel %vm548, %v544, %v504
        %v553 = vsel %vm549, %v545, %v505
        %v554 = vsel %vm550, %v546, %v506
        %v555 = vsel %vm551, %v547, %v507
        %v556 = vlaneseq
        %v557 = vshrl.u32 %v556, 7
        %v558 = vsub.s32 0, %v557
        %v559 = vrot.slane %v518, %v558
        %v560 = vsel %vm548, %v559, %v511
        %v561 = vsel %vm549, %v559, %v511
        %v562 = vsel %vm550, %v559, %v511
        %v563 = vsel %vm551, %v559, %v511
        %v564 = vlaneseq
        %v565 = vshrl.u32 %v564, 7
        %v566 = vsub.s32 0, %v565
        %v567 = vrot.slane %v519, %v566
        %v568 = vsel %vm548, %v567, %v515
        %v569 = vsel %vm549, %v567, %v515
        %v570 = vsel %vm550, %v567, %v515
        %v571 = vsel %vm551, %v567, %v515
        %v572 = vld [vmem:[%s382 + $0x2] sm:$0x1]
        %v573 = vld [vmem:[%s386 + $0x2] sm:$0x1]
        %v574 = vld [vmem:[%s390 + $0x2] sm:$0x1]
        %v575 = vld [vmem:[%s394 + $0x2] sm:$0x1]
        %v576 = vmul.f32 %v572, %v572
        %v577 = vmul.f32 %v573, %v573
        %v578 = vadd.f32 %v576, %v577
        %v579 = vlaneseq
        %v580 = vshrl.u32 %v579, 7
        %v581 = vsub.s32 0, %v580
        %v582 = vrot.slane %v572, %v581
        %v583 = vmul.f32 %v423, %v582
        %v584 = vmul.f32 %v424, %v582
        %v585 = vmul.f32 %v425, %v582
        %v586 = vmul.f32 %v426, %v582
        %v587 = vlaneseq
        %v588 = vshrl.u32 %v587, 7
        %v589 = vsub.s32 0, %v588
        %v590 = vrot.slane %v573, %v589
        %v591 = vmul.f32 %v427, %v590
        %v592 = vadd.f32 %v583, %v591
        %v593 = vadd.f32 %v584, %v591
        %v594 = vadd.f32 %v585, %v591
        %v595 = vadd.f32 %v586, %v591
        %v596 = vlaneseq
        %v597 = vshrl.u32 %v596, 7
        %v598 = vsub.s32 0, %v597
        %v599 = vrot.slane %v578, %v598
        %v600 = vadd.f32 %v592, %v599
        %v601 = vadd.f32 %v593, %v599
        %v602 = vadd.f32 %v594, %v599
        %v603 = vadd.f32 %v595, %v599
        %vm604 = vcmp.lt.f32.partialorder %v600, %v552
        %vm605 = vcmp.lt.f32.partialorder %v601, %v553
        %vm606 = vcmp.lt.f32.partialorder %v602, %v554
        %vm607 = vcmp.lt.f32.partialorder %v603, %v555
        %v608 = vsel %vm604, %v600, %v552
        %v609 = vsel %vm605, %v601, %v553
        %v610 = vsel %vm606, %v602, %v554
        %v611 = vsel %vm607, %v603, %v555
        %v612 = vlaneseq
        %v613 = vshrl.u32 %v612, 7
        %v614 = vsub.s32 0, %v613
        %v615 = vrot.slane %v574, %v614
        %v616 = vsel %vm604, %v615, %v560
        %v617 = vsel %vm605, %v615, %v561
        %v618 = vsel %vm606, %v615, %v562
        %v619 = vsel %vm607, %v615, %v563
        %v620 = vlaneseq
        %v621 = vshrl.u32 %v620, 7
        %v622 = vsub.s32 0, %v621
        %v623 = vrot.slane %v575, %v622
        %v624 = vsel %vm604, %v623, %v568
        %v625 = vsel %vm605, %v623, %v569
        %v626 = vsel %vm606, %v623, %v570
        %v627 = vsel %vm607, %v623, %v571
        %v628 = vld [vmem:[%s382 + $0x3] sm:$0x1]
        %v629 = vld [vmem:[%s386 + $0x3] sm:$0x1]
        %v630 = vld [vmem:[%s390 + $0x3] sm:$0x1]
        %v631 = vld [vmem:[%s394 + $0x3] sm:$0x1]
        %v632 = vmul.f32 %v628, %v628
        %v633 = vmul.f32 %v629, %v629
        %v634 = vadd.f32 %v632, %v633
        %v635 = vlaneseq
        %v636 = vshrl.u32 %v635, 7
        %v637 = vsub.s32 0, %v636
        %v638 = vrot.slane %v628, %v637
        %v639 = vmul.f32 %v423, %v638
        %v640 = vmul.f32 %v424, %v638
        %v641 = vmul.f32 %v425, %v638
        %v642 = vmul.f32 %v426, %v638
        %v643 = vlaneseq
        %v644 = vshrl.u32 %v643, 7
        %v645 = vsub.s32 0, %v644
        %v646 = vrot.slane %v629, %v645
        %v647 = vmul.f32 %v427, %v646
        %v648 = vadd.f32 %v639, %v647
        %v649 = vadd.f32 %v640, %v647
        %v650 = vadd.f32 %v641, %v647
        %v651 = vadd.f32 %v642, %v647
        %v652 = vlaneseq
        %v653 = vshrl.u32 %v652, 7
        %v654 = vsub.s32 0, %v653
        %v655 = vrot.slane %v634, %v654
        %v656 = vadd.f32 %v648, %v655
        %v657 = vadd.f32 %v649, %v655
        %v658 = vadd.f32 %v650, %v655
        %v659 = vadd.f32 %v651, %v655
        %vm660 = vcmp.lt.f32.partialorder %v656, %v608
        %vm661 = vcmp.lt.f32.partialorder %v657, %v609
        %vm662 = vcmp.lt.f32.partialorder %v658, %v610
        %vm663 = vcmp.lt.f32.partialorder %v659, %v611
        %v664 = vsel %vm660, %v656, %v608
        %v665 = vsel %vm661, %v657, %v609
        %v666 = vsel %vm662, %v658, %v610
        %v667 = vsel %vm663, %v659, %v611
        %v668 = vlaneseq
        %v669 = vshrl.u32 %v668, 7
        %v670 = vsub.s32 0, %v669
        %v671 = vrot.slane %v630, %v670
        %v672 = vsel %vm660, %v671, %v616
        %v673 = vsel %vm661, %v671, %v617
        %v674 = vsel %vm662, %v671, %v618
        %v675 = vsel %vm663, %v671, %v619
        %v676 = vlaneseq
        %v677 = vshrl.u32 %v676, 7
        %v678 = vsub.s32 0, %v677
        %v679 = vrot.slane %v631, %v678
        %v680 = vsel %vm660, %v679, %v624
        %v681 = vsel %vm661, %v679, %v625
        %v682 = vsel %vm662, %v679, %v626
        %v683 = vsel %vm663, %v679, %v627
        %v684 = vld [vmem:[%s382 + $0x4] sm:$0x1]
        %v685 = vld [vmem:[%s386 + $0x4] sm:$0x1]
        %v686 = vld [vmem:[%s390 + $0x4] sm:$0x1]
        %v687 = vld [vmem:[%s394 + $0x4] sm:$0x1]
        %v688 = vmul.f32 %v684, %v684
        %v689 = vmul.f32 %v685, %v685
        %v690 = vadd.f32 %v688, %v689
        %v691 = vlaneseq
        %v692 = vshrl.u32 %v691, 7
        %v693 = vsub.s32 0, %v692
        %v694 = vrot.slane %v684, %v693
        %v695 = vmul.f32 %v423, %v694
        %v696 = vmul.f32 %v424, %v694
        %v697 = vmul.f32 %v425, %v694
        %v698 = vmul.f32 %v426, %v694
        %v699 = vlaneseq
        %v700 = vshrl.u32 %v699, 7
        %v701 = vsub.s32 0, %v700
        %v702 = vrot.slane %v685, %v701
        %v703 = vmul.f32 %v427, %v702
        %v704 = vadd.f32 %v695, %v703
        %v705 = vadd.f32 %v696, %v703
        %v706 = vadd.f32 %v697, %v703
        %v707 = vadd.f32 %v698, %v703
        %v708 = vlaneseq
        %v709 = vshrl.u32 %v708, 7
        %v710 = vsub.s32 0, %v709
        %v711 = vrot.slane %v690, %v710
        %v712 = vadd.f32 %v704, %v711
        %v713 = vadd.f32 %v705, %v711
        %v714 = vadd.f32 %v706, %v711
        %v715 = vadd.f32 %v707, %v711
        %vm716 = vcmp.lt.f32.partialorder %v712, %v664
        %vm717 = vcmp.lt.f32.partialorder %v713, %v665
        %vm718 = vcmp.lt.f32.partialorder %v714, %v666
        %vm719 = vcmp.lt.f32.partialorder %v715, %v667
        %v720 = vsel %vm716, %v712, %v664
        %v721 = vsel %vm717, %v713, %v665
        %v722 = vsel %vm718, %v714, %v666
        %v723 = vsel %vm719, %v715, %v667
        %v724 = vlaneseq
        %v725 = vshrl.u32 %v724, 7
        %v726 = vsub.s32 0, %v725
        %v727 = vrot.slane %v686, %v726
        %v728 = vsel %vm716, %v727, %v672
        %v729 = vsel %vm717, %v727, %v673
        %v730 = vsel %vm718, %v727, %v674
        %v731 = vsel %vm719, %v727, %v675
        %v732 = vlaneseq
        %v733 = vshrl.u32 %v732, 7
        %v734 = vsub.s32 0, %v733
        %v735 = vrot.slane %v687, %v734
        %v736 = vsel %vm716, %v735, %v680
        %v737 = vsel %vm717, %v735, %v681
        %v738 = vsel %vm718, %v735, %v682
        %v739 = vsel %vm719, %v735, %v683
        %v740 = vld [vmem:[%s382 + $0x5] sm:$0x1]
        %v741 = vld [vmem:[%s386 + $0x5] sm:$0x1]
        %v742 = vld [vmem:[%s390 + $0x5] sm:$0x1]
        %v743 = vld [vmem:[%s394 + $0x5] sm:$0x1]
        %v744 = vmul.f32 %v740, %v740
        %v745 = vmul.f32 %v741, %v741
        %v746 = vadd.f32 %v744, %v745
        %v747 = vlaneseq
        %v748 = vshrl.u32 %v747, 7
        %v749 = vsub.s32 0, %v748
        %v750 = vrot.slane %v740, %v749
        %v751 = vmul.f32 %v423, %v750
        %v752 = vmul.f32 %v424, %v750
        %v753 = vmul.f32 %v425, %v750
        %v754 = vmul.f32 %v426, %v750
        %v755 = vlaneseq
        %v756 = vshrl.u32 %v755, 7
        %v757 = vsub.s32 0, %v756
        %v758 = vrot.slane %v741, %v757
        %v759 = vmul.f32 %v427, %v758
        %v760 = vadd.f32 %v751, %v759
        %v761 = vadd.f32 %v752, %v759
        %v762 = vadd.f32 %v753, %v759
        %v763 = vadd.f32 %v754, %v759
        %v764 = vlaneseq
        %v765 = vshrl.u32 %v764, 7
        %v766 = vsub.s32 0, %v765
        %v767 = vrot.slane %v746, %v766
        %v768 = vadd.f32 %v760, %v767
        %v769 = vadd.f32 %v761, %v767
        %v770 = vadd.f32 %v762, %v767
        %v771 = vadd.f32 %v763, %v767
        %vm772 = vcmp.lt.f32.partialorder %v768, %v720
        %vm773 = vcmp.lt.f32.partialorder %v769, %v721
        %vm774 = vcmp.lt.f32.partialorder %v770, %v722
        %vm775 = vcmp.lt.f32.partialorder %v771, %v723
        %v776 = vsel %vm772, %v768, %v720
        %v777 = vsel %vm773, %v769, %v721
        %v778 = vsel %vm774, %v770, %v722
        %v779 = vsel %vm775, %v771, %v723
        %v780 = vlaneseq
        %v781 = vshrl.u32 %v780, 7
        %v782 = vsub.s32 0, %v781
        %v783 = vrot.slane %v742, %v782
        %v784 = vsel %vm772, %v783, %v728
        %v785 = vsel %vm773, %v783, %v729
        %v786 = vsel %vm774, %v783, %v730
        %v787 = vsel %vm775, %v783, %v731
        %v788 = vlaneseq
        %v789 = vshrl.u32 %v788, 7
        %v790 = vsub.s32 0, %v789
        %v791 = vrot.slane %v743, %v790
        %v792 = vsel %vm772, %v791, %v736
        %v793 = vsel %vm773, %v791, %v737
        %v794 = vsel %vm774, %v791, %v738
        %v795 = vsel %vm775, %v791, %v739
        %v796 = vld [vmem:[%s382 + $0x6] sm:$0x1]
        %v797 = vld [vmem:[%s386 + $0x6] sm:$0x1]
        %v798 = vld [vmem:[%s390 + $0x6] sm:$0x1]
        %v799 = vld [vmem:[%s394 + $0x6] sm:$0x1]
        %v800 = vmul.f32 %v796, %v796
        %v801 = vmul.f32 %v797, %v797
        %v802 = vadd.f32 %v800, %v801
        %v803 = vlaneseq
        %v804 = vshrl.u32 %v803, 7
        %v805 = vsub.s32 0, %v804
        %v806 = vrot.slane %v796, %v805
        %v807 = vmul.f32 %v423, %v806
        %v808 = vmul.f32 %v424, %v806
        %v809 = vmul.f32 %v425, %v806
        %v810 = vmul.f32 %v426, %v806
        %v811 = vlaneseq
        %v812 = vshrl.u32 %v811, 7
        %v813 = vsub.s32 0, %v812
        %v814 = vrot.slane %v797, %v813
        %v815 = vmul.f32 %v427, %v814
        %v816 = vadd.f32 %v807, %v815
        %v817 = vadd.f32 %v808, %v815
        %v818 = vadd.f32 %v809, %v815
        %v819 = vadd.f32 %v810, %v815
        %v820 = vlaneseq
        %v821 = vshrl.u32 %v820, 7
        %v822 = vsub.s32 0, %v821
        %v823 = vrot.slane %v802, %v822
        %v824 = vadd.f32 %v816, %v823
        %v825 = vadd.f32 %v817, %v823
        %v826 = vadd.f32 %v818, %v823
        %v827 = vadd.f32 %v819, %v823
        %vm828 = vcmp.lt.f32.partialorder %v824, %v776
        %vm829 = vcmp.lt.f32.partialorder %v825, %v777
        %vm830 = vcmp.lt.f32.partialorder %v826, %v778
        %vm831 = vcmp.lt.f32.partialorder %v827, %v779
        %v832 = vsel %vm828, %v824, %v776
        %v833 = vsel %vm829, %v825, %v777
        %v834 = vsel %vm830, %v826, %v778
        %v835 = vsel %vm831, %v827, %v779
        %v836 = vlaneseq
        %v837 = vshrl.u32 %v836, 7
        %v838 = vsub.s32 0, %v837
        %v839 = vrot.slane %v798, %v838
        %v840 = vsel %vm828, %v839, %v784
        %v841 = vsel %vm829, %v839, %v785
        %v842 = vsel %vm830, %v839, %v786
        %v843 = vsel %vm831, %v839, %v787
        %v844 = vlaneseq
        %v845 = vshrl.u32 %v844, 7
        %v846 = vsub.s32 0, %v845
        %v847 = vrot.slane %v799, %v846
        %v848 = vsel %vm828, %v847, %v792
        %v849 = vsel %vm829, %v847, %v793
        %v850 = vsel %vm830, %v847, %v794
        %v851 = vsel %vm831, %v847, %v795
        %v852 = vld [vmem:[%s382 + $0x7] sm:$0x1]
        %v853 = vld [vmem:[%s386 + $0x7] sm:$0x1]
        %v854 = vld [vmem:[%s390 + $0x7] sm:$0x1]
        %v855 = vld [vmem:[%s394 + $0x7] sm:$0x1]
        %v856 = vmul.f32 %v852, %v852
        %v857 = vmul.f32 %v853, %v853
        %v858 = vadd.f32 %v856, %v857
        %v859 = vlaneseq
        %v860 = vshrl.u32 %v859, 7
        %v861 = vsub.s32 0, %v860
        %v862 = vrot.slane %v852, %v861
        %v863 = vmul.f32 %v423, %v862
        %v864 = vmul.f32 %v424, %v862
        %v865 = vmul.f32 %v425, %v862
        %v866 = vmul.f32 %v426, %v862
        %v867 = vlaneseq
        %v868 = vshrl.u32 %v867, 7
        %v869 = vsub.s32 0, %v868
        %v870 = vrot.slane %v853, %v869
        %v871 = vmul.f32 %v427, %v870
        %v872 = vadd.f32 %v863, %v871
        %v873 = vadd.f32 %v864, %v871
        %v874 = vadd.f32 %v865, %v871
        %v875 = vadd.f32 %v866, %v871
        %v876 = vlaneseq
        %v877 = vshrl.u32 %v876, 7
        %v878 = vsub.s32 0, %v877
        %v879 = vrot.slane %v858, %v878
        %v880 = vadd.f32 %v872, %v879
        %v881 = vadd.f32 %v873, %v879
        %v882 = vadd.f32 %v874, %v879
        %v883 = vadd.f32 %v875, %v879
        %vm884 = vcmp.lt.f32.partialorder %v880, %v832
        %vm885 = vcmp.lt.f32.partialorder %v881, %v833
        %vm886 = vcmp.lt.f32.partialorder %v882, %v834
        %vm887 = vcmp.lt.f32.partialorder %v883, %v835
        %v888 = vlaneseq
        %v889 = vshrl.u32 %v888, 7
        %v890 = vsub.s32 0, %v889
        %v891 = vrot.slane %v854, %v890
        %v892 = vsel %vm884, %v891, %v840
        %v893 = vsel %vm885, %v891, %v841
        %v894 = vsel %vm886, %v891, %v842
        %v895 = vsel %vm887, %v891, %v843
        %v896 = vlaneseq
        %v897 = vshrl.u32 %v896, 7
        %v898 = vsub.s32 0, %v897
        %v899 = vrot.slane %v855, %v898
        %v900 = vsel %vm884, %v899, %v848
        %v901 = vsel %vm885, %v899, %v849
        %v902 = vsel %vm886, %v899, %v850
        %v903 = vsel %vm887, %v899, %v851
        %v904 = vsel %vm468, %v892, %v511
        %v905 = vsel %vm469, %v893, %v511
        %v906 = vsel %vm470, %v894, %v511
        %v907 = vsel %vm471, %v895, %v511
        %v908 = vsel %vm468, %v900, %v515
        %v909 = vsel %vm469, %v901, %v515
        %v910 = vsel %vm470, %v902, %v515
        %v911 = vsel %vm471, %v903, %v515
        %v912 = vsel %vm472, 1.0, %v904
        %v913 = vsel %vm473, 1.0, %v905
        %v914 = vsel %vm474, 1.0, %v906
        %v915 = vsel %vm475, 1.0, %v907
        %v916 = vsel %vm472, 0.0, %v908
        %v917 = vsel %vm473, 0.0, %v909
        %v918 = vsel %vm474, 0.0, %v910
        %v919 = vsel %vm475, 0.0, %v911
        %v920 = vpack.c.bf16 %v913, %v912
        %v921 = vpack.c.bf16 %v915, %v914
        %v922 = vpack.c.bf16 %v917, %v916
        %v923 = vpack.c.bf16 %v919, %v918
        %v924 = vld [vmem:[%s7] sm:$0xf]
        %v925 = vld [vmem:[%s7 + $0x4] sm:$0xf]
        %v926 = vld [vmem:[%s7 + $0x8] sm:$0xf]
        %v927 = vld [vmem:[%s7 + $0xc] sm:$0xf]
        %v928 = vld [vmem:[%s7 + $0x10] sm:$0xf]
        %v929 = vld [vmem:[%s7 + $0x14] sm:$0xf]
        %v930 = vld [vmem:[%s7 + $0x18] sm:$0xf]
        %v931 = vld [vmem:[%s7 + $0x1c] sm:$0xf]
        %v940 = vunpack.c.l.b16 %v924
        %v941 = vunpack.c.l.b16 %v925
        %v942 = vunpack.c.l.b16 %v926
        %v943 = vunpack.c.l.b16 %v927
        %v944 = vunpack.c.l.b16 %v928
        %v945 = vunpack.c.l.b16 %v929
        %v946 = vunpack.c.l.b16 %v930
        %v947 = vunpack.c.l.b16 %v931
        %v948 = vpack.c.b16 %v941, %v940
        %v949 = vpack.c.b16 %v943, %v942
        %v950 = vpack.c.b16 %v945, %v944
        %v951 = vpack.c.b16 %v947, %v946
        %vm952 = vcmask 523264
        %v954 = vsel %vm952, %v948, 0
        %v957 = vsel %vm952, %v949, 0
        %v960 = vsel %vm952, %v950, 0
        %v963 = vsel %vm952, %v951, 0
        %965 = vmatprep.subr.bf16.mxu0 0
        %966 = vmatpush1.bf16.msra.mxu0 %v920
        %967 = vmatprep.subr.bf16.mxu0 0
        %968 = vmatpush1.bf16.msra.mxu0 %v921
        %969 = vmatprep.subr.bf16.mxu0 0
        %970 = vmatpush1.bf16.msra.mxu0 %v922
        %971 = vmatprep.subr.bf16.mxu0 0
        %972 = vmatpush1.bf16.msra.mxu0 %v923
        %973 = vmatprep.subr.bf16.mxu0 0
        %974 = vmatpush1.bf16.msra.mxu0 0
        %975 = vmatprep.subr.bf16.mxu0 0
        %976 = vmatpush1.bf16.msra.mxu0 0
        %977 = vmatprep.subr.bf16.mxu0 0
        %978 = vmatpush1.bf16.msra.mxu0 0
        %979 = vmatprep.subr.bf16.mxu0 0
        %980 = vmatpush1.bf16.msra.mxu0 0
        %981 = vmatprep.subr.bf16.mxu0 0
        %982 = vmatpush1.bf16.msra.mxu0 0
        %983 = vmatprep.subr.bf16.mxu0 0
        %984 = vmatpush1.bf16.msra.mxu0 0
        %985 = vmatprep.subr.bf16.mxu0 0
        %986 = vmatpush1.bf16.msra.mxu0 0
        %987 = vmatprep.subr.bf16.mxu0 0
        %988 = vmatpush1.bf16.msra.mxu0 0
        %989 = vmatprep.subr.bf16.mxu0 0
        %990 = vmatpush1.bf16.msra.mxu0 0
        %991 = vmatprep.subr.bf16.mxu0 0
        %992 = vmatpush1.bf16.msra.mxu0 0
        %993 = vmatprep.subr.bf16.mxu0 0
        %994 = vmatpush1.bf16.msra.mxu0 0
        %995 = vmatprep.subr.bf16.mxu0 0
        %996 = vmatpush1.bf16.msra.mxu0 0
        %997 = vmatprep.mubr.bf16.mxu0 0
        %998 = vmatmul.mubr.bf16.gmra.mrb[0].mxu0 %v954
        %v999 = vpop.f32.mrb[0].mxu0
        %v1000 = vadd.f32 0.0, %v999
        %v1001 = vpop.f32.mrb[0].mxu0
        %v1002 = vpop.f32.mrb[0].mxu0
        %v1003 = vadd.f32 0.0, %v1002
        %v1004 = vpop.f32.mrb[0].mxu0
        %1005 = vmatprep.mubr.bf16.mxu0 0
        %1006 = vmatmul.mubr.bf16.gmra.mrb[0].mxu0 %v957
        %v1007 = vpop.f32.mrb[0].mxu0
        %v1008 = vadd.f32 0.0, %v1007
        %v1009 = vpop.f32.mrb[0].mxu0
        %v1010 = vpop.f32.mrb[0].mxu0
        %v1011 = vadd.f32 0.0, %v1010
        %v1012 = vpop.f32.mrb[0].mxu0
        %1013 = vmatprep.mubr.bf16.mxu0 0
        %1014 = vmatmul.mubr.bf16.gmra.mrb[0].mxu0 %v960
        %v1015 = vpop.f32.mrb[0].mxu0
        %v1016 = vadd.f32 0.0, %v1015
        %v1017 = vpop.f32.mrb[0].mxu0
        %v1018 = vpop.f32.mrb[0].mxu0
        %v1019 = vadd.f32 0.0, %v1018
        %v1020 = vpop.f32.mrb[0].mxu0
        %1021 = vmatprep.mubr.bf16.mxu0 0
        %1022 = vmatmul.mubr.bf16.gmra.mrb[0].mxu0 %v963
        %v1023 = vpop.f32.mrb[0].mxu0
        %v1024 = vadd.f32 0.0, %v1023
        %v1025 = vpop.f32.mrb[0].mxu0
        %v1026 = vpop.f32.mrb[0].mxu0
        %v1027 = vadd.f32 0.0, %v1026
        %v1028 = vpop.f32.mrb[0].mxu0
        %1029 = vdwg.mxu0
        %v1030 = vpack.c.bf16 %v1003, %v1000
        %v1031 = vpack.c.bf16 %v1019, %v1016
        %v1032 = vpack.c.bf16 %v1011, %v1008
        %v1033 = vpack.c.bf16 %v1027, %v1024
        %v1034 = vld [vmem:[%s8] sm:$0xff]
        %v1035 = vld [vmem:[%s8 + $0x8] sm:$0xff]
        %v1036 = vld [vmem:[%s8 + $0x10] sm:$0xff]
        %v1037 = vld [vmem:[%s8 + $0x18] sm:$0xff]
        %v1038 = vld [vmem:[%s8 + $0x20] sm:$0xff]
        %v1039 = vld [vmem:[%s8 + $0x28] sm:$0xff]
        %v1040 = vld [vmem:[%s8 + $0x30] sm:$0xff]
        %v1041 = vld [vmem:[%s8 + $0x38] sm:$0xff]
        %v1042 = vld [vmem:[%s8 + $0x40] sm:$0xff]
        %v1043 = vld [vmem:[%s8 + $0x48] sm:$0xff]
        %v1044 = vld [vmem:[%s8 + $0x50] sm:$0xff]
        %v1045 = vld [vmem:[%s8 + $0x58] sm:$0xff]
        %v1046 = vld [vmem:[%s8 + $0x60] sm:$0xff]
        %v1047 = vld [vmem:[%s8 + $0x68] sm:$0xff]
        %v1048 = vld [vmem:[%s8 + $0x70] sm:$0xff]
        %v1049 = vld [vmem:[%s8 + $0x78] sm:$0xff]
        %v1050 = vld [vmem:[%s8 + $0x80] sm:$0xff]
        %v1051 = vld [vmem:[%s8 + $0x88] sm:$0xff]
        %v1052 = vld [vmem:[%s8 + $0x90] sm:$0xff]
        %v1053 = vld [vmem:[%s8 + $0x98] sm:$0xff]
        %v1054 = vld [vmem:[%s8 + $0xa0] sm:$0xff]
        %v1055 = vld [vmem:[%s8 + $0xa8] sm:$0xff]
        %v1056 = vld [vmem:[%s8 + $0xb0] sm:$0xff]
        %v1057 = vld [vmem:[%s8 + $0xb8] sm:$0xff]
        %v1058 = vld [vmem:[%s8 + $0xc0] sm:$0xff]
        %v1059 = vld [vmem:[%s8 + $0xc8] sm:$0xff]
        %v1060 = vld [vmem:[%s8 + $0xd0] sm:$0xff]
        %v1061 = vld [vmem:[%s8 + $0xd8] sm:$0xff]
        %v1062 = vld [vmem:[%s8 + $0xe0] sm:$0xff]
        %v1063 = vld [vmem:[%s8 + $0xe8] sm:$0xff]
        %v1064 = vld [vmem:[%s8 + $0xf0] sm:$0xff]
        %v1065 = vld [vmem:[%s8 + $0xf8] sm:$0xff]
        %v1098 = vunpack.c.l.b16 %v1034
        %v1099 = vunpack.c.h.b16 %v1034
        %v1100 = vunpack.c.l.b16 %v1035
        %v1101 = vunpack.c.h.b16 %v1035
        %v1102 = vunpack.c.l.b16 %v1036
        %v1103 = vunpack.c.h.b16 %v1036
        %v1104 = vunpack.c.l.b16 %v1037
        %v1105 = vunpack.c.h.b16 %v1037
        %v1106 = vunpack.c.l.b16 %v1038
        %v1107 = vunpack.c.h.b16 %v1038
        %v1108 = vunpack.c.l.b16 %v1039
        %v1109 = vunpack.c.h.b16 %v1039
        %v1110 = vunpack.c.l.b16 %v1040
        %v1111 = vunpack.c.h.b16 %v1040
        %v1112 = vunpack.c.l.b16 %v1041
        %v1113 = vunpack.c.h.b16 %v1041
        %v1114 = vunpack.c.l.b16 %v1042
        %v1115 = vunpack.c.h.b16 %v1042
        %v1116 = vunpack.c.l.b16 %v1043
        %v1117 = vunpack.c.h.b16 %v1043
        %v1118 = vunpack.c.l.b16 %v1044
        %v1119 = vunpack.c.h.b16 %v1044
        %v1120 = vunpack.c.l.b16 %v1045
        %v1121 = vunpack.c.h.b16 %v1045
        %v1122 = vunpack.c.l.b16 %v1046
        %v1123 = vunpack.c.h.b16 %v1046
        %v1124 = vunpack.c.l.b16 %v1047
        %v1125 = vunpack.c.h.b16 %v1047
        %v1126 = vunpack.c.l.b16 %v1048
        %v1127 = vunpack.c.h.b16 %v1048
        %v1128 = vunpack.c.l.b16 %v1049
        %v1129 = vunpack.c.h.b16 %v1049
        %v1130 = vunpack.c.l.b16 %v1050
        %v1131 = vunpack.c.h.b16 %v1050
        %v1132 = vunpack.c.l.b16 %v1051
        %v1133 = vunpack.c.h.b16 %v1051
        %v1134 = vunpack.c.l.b16 %v1052
        %v1135 = vunpack.c.h.b16 %v1052
        %v1136 = vunpack.c.l.b16 %v1053
        %v1137 = vunpack.c.h.b16 %v1053
        %v1138 = vunpack.c.l.b16 %v1054
        %v1139 = vunpack.c.h.b16 %v1054
        %v1140 = vunpack.c.l.b16 %v1055
        %v1141 = vunpack.c.h.b16 %v1055
        %v1142 = vunpack.c.l.b16 %v1056
        %v1143 = vunpack.c.h.b16 %v1056
        %v1144 = vunpack.c.l.b16 %v1057
        %v1145 = vunpack.c.h.b16 %v1057
        %v1146 = vunpack.c.l.b16 %v1058
        %v1147 = vunpack.c.h.b16 %v1058
        %v1148 = vunpack.c.l.b16 %v1059
        %v1149 = vunpack.c.h.b16 %v1059
        %v1150 = vunpack.c.l.b16 %v1060
        %v1151 = vunpack.c.h.b16 %v1060
        %v1152 = vunpack.c.l.b16 %v1061
        %v1153 = vunpack.c.h.b16 %v1061
        %v1154 = vunpack.c.l.b16 %v1062
        %v1155 = vunpack.c.h.b16 %v1062
        %v1156 = vunpack.c.l.b16 %v1063
        %v1157 = vunpack.c.h.b16 %v1063
        %v1158 = vunpack.c.l.b16 %v1064
        %v1159 = vunpack.c.h.b16 %v1064
        %v1160 = vunpack.c.l.b16 %v1065
        %v1161 = vunpack.c.h.b16 %v1065
        %v1162 = vpack.c.b16 %v1100, %v1098
        %v1163 = vpack.c.b16 %v1101, %v1099
        %v1164 = vpack.c.b16 %v1104, %v1102
        %v1165 = vpack.c.b16 %v1105, %v1103
        %v1166 = vpack.c.b16 %v1108, %v1106
        %v1167 = vpack.c.b16 %v1109, %v1107
        %v1168 = vpack.c.b16 %v1112, %v1110
        %v1169 = vpack.c.b16 %v1113, %v1111
        %v1170 = vpack.c.b16 %v1116, %v1114
        %v1171 = vpack.c.b16 %v1117, %v1115
        %v1172 = vpack.c.b16 %v1120, %v1118
        %v1173 = vpack.c.b16 %v1121, %v1119
        %v1174 = vpack.c.b16 %v1124, %v1122
        %v1175 = vpack.c.b16 %v1125, %v1123
        %v1176 = vpack.c.b16 %v1128, %v1126
        %v1177 = vpack.c.b16 %v1129, %v1127
        %v1178 = vpack.c.b16 %v1132, %v1130
        %v1179 = vpack.c.b16 %v1133, %v1131
        %v1180 = vpack.c.b16 %v1136, %v1134
        %v1181 = vpack.c.b16 %v1137, %v1135
        %v1182 = vpack.c.b16 %v1140, %v1138
        %v1183 = vpack.c.b16 %v1141, %v1139
        %v1184 = vpack.c.b16 %v1144, %v1142
        %v1185 = vpack.c.b16 %v1145, %v1143
        %v1186 = vpack.c.b16 %v1148, %v1146
        %v1187 = vpack.c.b16 %v1149, %v1147
        %v1188 = vpack.c.b16 %v1152, %v1150
        %v1189 = vpack.c.b16 %v1153, %v1151
        %v1190 = vpack.c.b16 %v1156, %v1154
        %v1191 = vpack.c.b16 %v1157, %v1155
        %v1192 = vpack.c.b16 %v1160, %v1158
        %v1193 = vpack.c.b16 %v1161, %v1159
        %1226 = vmatprep.subr.bf16.mxu0 %v1163
        %1227 = vmatpush1.bf16.msra.mxu0 %v1162
        %1228 = vmatprep.subr.bf16.mxu0 %v1165
        %1229 = vmatpush1.bf16.msra.mxu0 %v1164
        %1230 = vmatprep.subr.bf16.mxu0 %v1167
        %1231 = vmatpush1.bf16.msra.mxu0 %v1166
        %1232 = vmatprep.subr.bf16.mxu0 %v1169
        %1233 = vmatpush1.bf16.msra.mxu0 %v1168
        %1234 = vmatprep.subr.bf16.mxu0 %v1171
        %1235 = vmatpush1.bf16.msra.mxu0 %v1170
        %1236 = vmatprep.subr.bf16.mxu0 %v1173
        %1237 = vmatpush1.bf16.msra.mxu0 %v1172
        %1238 = vmatprep.subr.bf16.mxu0 %v1175
        %1239 = vmatpush1.bf16.msra.mxu0 %v1174
        %1240 = vmatprep.subr.bf16.mxu0 %v1177
        %1241 = vmatpush1.bf16.msra.mxu0 %v1176
        %1242 = vmatprep.subr.bf16.mxu0 %v1179
        %1243 = vmatpush1.bf16.msra.mxu0 %v1178
        %1244 = vmatprep.subr.bf16.mxu0 %v1181
        %1245 = vmatpush1.bf16.msra.mxu0 %v1180
        %1246 = vmatprep.subr.bf16.mxu0 %v1183
        %1247 = vmatpush1.bf16.msra.mxu0 %v1182
        %1248 = vmatprep.subr.bf16.mxu0 %v1185
        %1249 = vmatpush1.bf16.msra.mxu0 %v1184
        %1250 = vmatprep.subr.bf16.mxu0 %v1187
        %1251 = vmatpush1.bf16.msra.mxu0 %v1186
        %1252 = vmatprep.subr.bf16.mxu0 %v1189
        %1253 = vmatpush1.bf16.msra.mxu0 %v1188
        %1254 = vmatprep.subr.bf16.mxu0 %v1191
        %1255 = vmatpush1.bf16.msra.mxu0 %v1190
        %1256 = vmatprep.subr.bf16.mxu0 %v1193
        %1257 = vmatpush1.bf16.msra.mxu0 %v1192
        %1258 = vmatprep.mubr.bf16.mxu0 %v1031
        %1259 = vmatmul.mubr.bf16.gmra.mrb[0].mxu0 %v1030
        %v1260 = vpop.f32.mrb[0].mxu0
        %v1261 = vadd.f32 0.0, %v1260
        %v1262 = vpop.f32.mrb[0].mxu0
        %v1263 = vadd.f32 0.0, %v1262
        %v1264 = vpop.f32.mrb[0].mxu0
        %v1265 = vadd.f32 0.0, %v1264
        %v1266 = vpop.f32.mrb[0].mxu0
        %v1267 = vadd.f32 0.0, %v1266
        %1268 = vmatprep.mubr.bf16.mxu0 %v1033
        %1269 = vmatmul.mubr.bf16.gmra.mrb[0].mxu0 %v1032
        %v1270 = vpop.f32.mrb[0].mxu0
        %v1271 = vadd.f32 0.0, %v1270
        %v1272 = vpop.f32.mrb[0].mxu0
        %v1273 = vadd.f32 0.0, %v1272
        %v1274 = vpop.f32.mrb[0].mxu0
        %v1275 = vadd.f32 0.0, %v1274
        %v1276 = vpop.f32.mrb[0].mxu0
        %v1277 = vadd.f32 0.0, %v1276
        %1278 = vdwg.mxu0
        %v1279 = vmul.f32 %v1261, %v1261
        %v1280 = vmul.f32 %v1265, %v1265
        %v1281 = vmul.f32 %v1271, %v1271
        %v1282 = vmul.f32 %v1275, %v1275
        %v1283 = vmul.f32 %v1263, %v1263
        %v1284 = vmul.f32 %v1267, %v1267
        %v1285 = vmul.f32 %v1273, %v1273
        %v1286 = vmul.f32 %v1277, %v1277
        %v1287 = vadd.f32 %v1279, %v1283
        %v1288 = vadd.f32 %v1280, %v1284
        %v1289 = vadd.f32 %v1281, %v1285
        %v1290 = vadd.f32 %v1282, %v1286
        %v1291 = vrsqrt.pop %v1287
        %v1292 = vmul.f32 %v1287, %v1291
        %vm1293 = vcmp.eq.f32.partialorder %v1287, inf
        %v1294 = vsel %vm1293, %v1287, %v1292
        %vm1295 = vcmp.eq.f32.partialorder %v1287, 0.0
        %v1296 = vand.u32 %v1287, 2147483648
        %v1297 = vsel %vm1295, %v1296, %v1294
        %v1298 = vrsqrt.pop %v1288
        %v1299 = vmul.f32 %v1288, %v1298
        %vm1300 = vcmp.eq.f32.partialorder %v1288, inf
        %v1301 = vsel %vm1300, %v1288, %v1299
        %vm1302 = vcmp.eq.f32.partialorder %v1288, 0.0
        %v1303 = vand.u32 %v1288, 2147483648
        %v1304 = vsel %vm1302, %v1303, %v1301
        %v1305 = vrsqrt.pop %v1289
        %v1306 = vmul.f32 %v1289, %v1305
        %vm1307 = vcmp.eq.f32.partialorder %v1289, inf
        %v1308 = vsel %vm1307, %v1289, %v1306
        %vm1309 = vcmp.eq.f32.partialorder %v1289, 0.0
        %v1310 = vand.u32 %v1289, 2147483648
        %v1311 = vsel %vm1309, %v1310, %v1308
        %v1312 = vrsqrt.pop %v1290
        %v1313 = vmul.f32 %v1290, %v1312
        %vm1314 = vcmp.eq.f32.partialorder %v1290, inf
        %v1315 = vsel %vm1314, %v1290, %v1313
        %vm1316 = vcmp.eq.f32.partialorder %v1290, 0.0
        %v1317 = vand.u32 %v1290, 2147483648
        %v1318 = vsel %vm1316, %v1317, %v1315
        %v1319 = vld [vmem:[%s398] sm:$0x1]
        %v1320 = vld [vmem:[%s398 + $0x1] sm:$0x1]
        %v1321 = vlaneseq
        %v1322 = vshrl.u32 %v1321, 7
        %v1323 = vsub.s32 0, %v1322
        %v1324 = vrot.slane %v1319, %v1323
        %v1325 = vsub.f32 %v413, %v1324
        %v1326 = vsub.f32 %v414, %v1324
        %v1327 = vsub.f32 %v415, %v1324
        %v1328 = vsub.f32 %v416, %v1324
        %v1329 = vmul.f32 %v1325, %v1325
        %v1330 = vmul.f32 %v1326, %v1326
        %v1331 = vmul.f32 %v1327, %v1327
        %v1332 = vmul.f32 %v1328, %v1328
        %v1333 = vsub.f32 0.0, %v1329
        %v1334 = vsub.f32 0.0, %v1330
        %v1335 = vsub.f32 0.0, %v1331
        %v1336 = vsub.f32 0.0, %v1332
        %v1337 = vmul.f32 %v1333, 0.22222222
        %v1338 = vmul.f32 %v1334, 0.22222222
        %v1339 = vmul.f32 %v1335, 0.22222222
        %v1340 = vmul.f32 %v1336, 0.22222222
        %v1341 = vmul.f32 %v1337, 1.442695
        %v1342 = vpow.pop %v1341
        %v1343 = vmul.f32 %v1338, 1.442695
        %v1344 = vpow.pop %v1343
        %v1345 = vmul.f32 %v1339, 1.442695
        %v1346 = vpow.pop %v1345
        %v1347 = vmul.f32 %v1340, 1.442695
        %v1348 = vpow.pop %v1347
        %v1349 = vlaneseq
        %v1350 = vshrl.u32 %v1349, 7
        %v1351 = vsub.s32 0, %v1350
        %v1352 = vrot.slane %v1320, %v1351
        %v1353 = vmul.f32 %v1352, %v1342
        %v1354 = vmul.f32 %v1352, %v1344
        %v1355 = vmul.f32 %v1352, %v1346
        %v1356 = vmul.f32 %v1352, %v1348
        %v1357 = vld [vmem:[%s403] sm:$0xff]
        %v1358 = vld [vmem:[%s403 + $0x8] sm:$0xff]
        %v1359 = vld [vmem:[%s403 + $0x10] sm:$0xff]
        %v1360 = vld [vmem:[%s403 + $0x18] sm:$0xff]
        %v1361 = vld [vmem:[%s6] sm:$0xff]
        %v1362 = vld [vmem:[%s6 + $0x8] sm:$0xff]
        %v1363 = vld [vmem:[%s6 + $0x10] sm:$0xff]
        %v1364 = vld [vmem:[%s6 + $0x18] sm:$0xff]
        %1366 = vset.pattern.permute.xlu0 0
        %1367 = vperm.xlu0 %1366, %v1357
        %v1368 = vpop.permute.xlu0 %1367
        %1371 = vset.pattern.permute.xlu0 0
        %1372 = vperm.xlu0 %1371, %v1358
        %v1373 = vpop.permute.xlu0 %1372
        %1376 = vset.pattern.permute.xlu0 0
        %1377 = vperm.xlu0 %1376, %v1359
        %v1378 = vpop.permute.xlu0 %1377
        %1381 = vset.pattern.permute.xlu0 0
        %1382 = vperm.xlu0 %1381, %v1360
        %v1383 = vpop.permute.xlu0 %1382
        %v1385 = vsub.f32 %v417, %v1368
        %v1386 = vsub.f32 %v417, %v1373
        %v1387 = vsub.f32 %v417, %v1378
        %v1388 = vsub.f32 %v417, %v1383
        %v1389 = vmul.f32 %v1385, %v1385
        %v1390 = vmul.f32 %v1386, %v1386
        %v1391 = vmul.f32 %v1387, %v1387
        %v1392 = vmul.f32 %v1388, %v1388
        %v1393 = vsub.f32 0.0, %v1389
        %v1394 = vsub.f32 0.0, %v1390
        %v1395 = vsub.f32 0.0, %v1391
        %v1396 = vsub.f32 0.0, %v1392
        %v1397 = vmul.f32 %v1393, 0.22222222
        %v1398 = vmul.f32 %v1394, 0.22222222
        %v1399 = vmul.f32 %v1395, 0.22222222
        %v1400 = vmul.f32 %v1396, 0.22222222
        %v1401 = vmul.f32 %v1397, 1.442695
        %v1402 = vpow.pop %v1401
        %v1403 = vmul.f32 %v1398, 1.442695
        %v1404 = vpow.pop %v1403
        %v1405 = vmul.f32 %v1399, 1.442695
        %v1406 = vpow.pop %v1405
        %v1407 = vmul.f32 %v1400, 1.442695
        %v1408 = vpow.pop %v1407
        %v1409 = vmul.f32 %v1361, %v1402
        %v1410 = vmul.f32 %v1362, %v1404
        %v1411 = vmul.f32 %v1363, %v1406
        %v1412 = vmul.f32 %v1364, %v1408
        %vm1413 = vcmask 261120
        %v1415 = vsel %vm1413, %v1353, 0
        %v1418 = vsel %vm1413, %v1354, 0
        %v1421 = vsel %vm1413, %v1355, 0
        %v1424 = vsel %vm1413, %v1356, 0
        %1426 = vmatprep.subr.mxu0 0.0
        %1427 = vmatpush1.msra.mxu0 %v1409
        %1428 = vmatprep.subr.mxu0 0.0
        %1429 = vmatpush1.msra.mxu0 %v1410
        %1430 = vmatprep.subr.mxu0 0.0
        %1431 = vmatpush1.msra.mxu0 %v1411
        %1432 = vmatprep.subr.mxu0 0.0
        %1433 = vmatpush1.msra.mxu0 %v1412
        %1434 = vmatprep.subr.mxu0 0.0
        %1435 = vmatpush1.msra.mxu0 0.0
        %1436 = vmatprep.subr.mxu0 0.0
        %1437 = vmatpush1.msra.mxu0 0.0
        %1438 = vmatprep.subr.mxu0 0.0
        %1439 = vmatpush1.msra.mxu0 0.0
        %1440 = vmatprep.subr.mxu0 0.0
        %1441 = vmatpush1.msra.mxu0 0.0
        %1442 = vmatprep.subr.mxu0 0.0
        %1443 = vmatpush1.msra.mxu0 0.0
        %1444 = vmatprep.subr.mxu0 0.0
        %1445 = vmatpush1.msra.mxu0 0.0
        %1446 = vmatprep.subr.mxu0 0.0
        %1447 = vmatpush1.msra.mxu0 0.0
        %1448 = vmatprep.subr.mxu0 0.0
        %1449 = vmatpush1.msra.mxu0 0.0
        %1450 = vmatprep.subr.mxu0 0.0
        %1451 = vmatpush1.msra.mxu0 0.0
        %1452 = vmatprep.subr.mxu0 0.0
        %1453 = vmatpush1.msra.mxu0 0.0
        %1454 = vmatprep.subr.mxu0 0.0
        %1455 = vmatpush1.msra.mxu0 0.0
        %1456 = vmatprep.subr.mxu0 0.0
        %1457 = vmatpush1.msra.mxu0 0.0
        %1458 = vmatprep.subr.mxu0 0.0
        %1459 = vmatpush1.msra.mxu0 0.0
        %1460 = vmatprep.subr.mxu0 0.0
        %1461 = vmatpush1.msra.mxu0 0.0
        %1462 = vmatprep.subr.mxu0 0.0
        %1463 = vmatpush1.msra.mxu0 0.0
        %1464 = vmatprep.subr.mxu0 0.0
        %1465 = vmatpush1.msra.mxu0 0.0
        %1466 = vmatprep.subr.mxu0 0.0
        %1467 = vmatpush1.msra.mxu0 0.0
        %1468 = vmatprep.subr.mxu0 0.0
        %1469 = vmatpush1.msra.mxu0 0.0
        %1470 = vmatprep.subr.mxu0 0.0
        %1471 = vmatpush1.msra.mxu0 0.0
        %1472 = vmatprep.subr.mxu0 0.0
        %1473 = vmatpush1.msra.mxu0 0.0
        %1474 = vmatprep.subr.mxu0 0.0
        %1475 = vmatpush1.msra.mxu0 0.0
        %1476 = vmatprep.subr.mxu0 0.0
        %1477 = vmatpush1.msra.mxu0 0.0
        %1478 = vmatprep.subr.mxu0 0.0
        %1479 = vmatpush1.msra.mxu0 0.0
        %1480 = vmatprep.subr.mxu0 0.0
        %1481 = vmatpush1.msra.mxu0 0.0
        %1482 = vmatprep.subr.mxu0 0.0
        %1483 = vmatpush1.msra.mxu0 0.0
        %1484 = vmatprep.subr.mxu0 0.0
        %1485 = vmatpush1.msra.mxu0 0.0
        %1486 = vmatprep.subr.mxu0 0.0
        %1487 = vmatpush1.msra.mxu0 0.0
        %1488 = vmatprep.subr.mxu0 0.0
        %1489 = vmatpush1.msra.mxu0 0.0
        %1490 = vmatprep.mubr.f32.mxu0 0.0
        %1491 = vmatmul.mubr.f32.gmra.mrb[0].mxu0 %v1415
        %v1492 = vpop.f32.mrb[0].mxu0
        %v1493 = vadd.f32 0.0, %v1492
        %v1494 = vpop.f32.mrb[0].mxu0
        %1495 = vmatprep.mubr.f32.mxu0 0.0
        %1496 = vmatmul.mubr.f32.gmra.mrb[0].mxu0 %v1418
        %v1497 = vpop.f32.mrb[0].mxu0
        %v1498 = vadd.f32 0.0, %v1497
        %v1499 = vpop.f32.mrb[0].mxu0
        %1500 = vmatprep.mubr.f32.mxu0 0.0
        %1501 = vmatmul.mubr.f32.gmra.mrb[0].mxu0 %v1421
        %v1502 = vpop.f32.mrb[0].mxu0
        %v1503 = vadd.f32 0.0, %v1502
        %v1504 = vpop.f32.mrb[0].mxu0
        %1505 = vmatprep.mubr.f32.mxu0 0.0
        %1506 = vmatmul.mubr.f32.gmra.mrb[0].mxu0 %v1424
        %v1507 = vpop.f32.mrb[0].mxu0
        %v1508 = vadd.f32 0.0, %v1507
        %v1509 = vpop.f32.mrb[0].mxu0
        %1510 = vdwg.mxu0
        %p1511 = scmp.eq.s32.totalorder %s21, 0
        // Predicated region
        $region57: #{_custom_loss_fn.1} parent=55 // pred_check
          %p1512 = pneg %p1511
        $region58: #{_custom_loss_fn.1} parent=55 // pred_check_branch
          %1514 = sbr.rel (%p1512) target = $region60
        $region59: #{_custom_loss_fn.1} parent=55 // pred_region
          %vm1515 = vcmask 0
          %1516 = vst.msk [vmem:[#allocation2] sm:$0x1] %vm1515, 0.0
          %1517 = vst.msk [vmem:[#allocation3] sm:$0x1] %vm1515, 0.0
          %1518 = vst.msk [vmem:[#allocation4] sm:$0x1] %vm1515, 0.0
          %1519 = vst.msk [vmem:[#allocation5] sm:$0x1] %vm1515, 0.0
          %1520 = vst.msk [vmem:[#allocation6] sm:$0x1] %vm1515, 0.0
        $region60: #{_custom_loss_fn.1} parent=55 // pred_fallthru
          _
        %v1521 = vld [vmem:[#allocation2] sm:$0x1]
        %v1522 = vmax.f32 %v1297, %v1304
        %v1523 = vmax.f32 %v1311, %v1318
        %v1524 = vmax.f32 %v1522, %v1523
        %1525 = vmax.xlane.f32.xlu0 %v1524
        %v1526 = vpop.xlane.xlu0 %1525
        %v1527 = vrot.slane %v1526, 4
        %v1528 = vmax.f32 %v1526, %v1527
        %v1529 = vrot.slane %v1528, 2
        %v1530 = vmax.f32 %v1528, %v1529
        %v1531 = vrot.slane %v1530, 1
        %v1532 = vmax.f32 %v1530, %v1531
        %s1533 = vtos %v1532
        %v1534 = vstv %s1533
        %v1535 = vmax.f32 %v1521, %v1534
        %vm1536 = vcmask 0
        %1537 = vst.msk [vmem:[#allocation2] sm:$0x1] %vm1536, %v1535
        %v1538 = vld [vmem:[#allocation3] sm:$0x1]
        %v1539 = vmax.f32 %v1493, %v1498
        %v1540 = vmax.f32 %v1503, %v1508
        %v1541 = vmax.f32 %v1539, %v1540
        %1542 = vmax.xlane.f32.xlu0 %v1541
        %v1543 = vpop.xlane.xlu0 %1542
        %v1544 = vrot.slane %v1543, 4
        %v1545 = vmax.f32 %v1543, %v1544
        %v1546 = vrot.slane %v1545, 2
        %v1547 = vmax.f32 %v1545, %v1546
        %v1548 = vrot.slane %v1547, 1
        %v1549 = vmax.f32 %v1547, %v1548
        %s1550 = vtos %v1549
        %v1551 = vstv %s1550
        %v1552 = vmax.f32 %v1538, %v1551
        %1553 = vst.msk [vmem:[#allocation3] sm:$0x1] %vm1536, %v1552
        %v1554 = vld [vmem:[#allocation4] sm:$0x1]
        %v1555 = vmul.f32 %v1297, %v1297
        %v1556 = vmul.f32 %v1304, %v1304
        %v1557 = vmul.f32 %v1311, %v1311
        %v1558 = vmul.f32 %v1318, %v1318
        %v1559 = vadd.f32 %v1555, %v1556
        %v1560 = vadd.f32 %v1559, %v1557
        %v1561 = vadd.f32 %v1560, %v1558
        %1562 = vadd.xlane.f32.xlu0 %v1561
        %v1563 = vpop.xlane.xlu0 %1562
        %v1564 = vrot.slane %v1563, 4
        %v1565 = vadd.f32 %v1563, %v1564
        %v1566 = vrot.slane %v1565, 2
        %v1567 = vadd.f32 %v1565, %v1566
        %v1568 = vrot.slane %v1567, 1
        %v1569 = vadd.f32 %v1567, %v1568
        %s1570 = vtos %v1569
        %v1571 = vstv %s1570
        %v1572 = vadd.f32 %v1554, %v1571
        %1573 = vst.msk [vmem:[#allocation4] sm:$0x1] %vm1536, %v1572
        %v1574 = vld [vmem:[#allocation5] sm:$0x1]
        %v1575 = vmul.f32 %v1493, %v1493
        %v1576 = vmul.f32 %v1498, %v1498
        %v1577 = vmul.f32 %v1503, %v1503
        %v1578 = vmul.f32 %v1508, %v1508
        %v1579 = vadd.f32 %v1575, %v1576
        %v1580 = vadd.f32 %v1579, %v1577
        %v1581 = vadd.f32 %v1580, %v1578
        %1582 = vadd.xlane.f32.xlu0 %v1581
        %v1583 = vpop.xlane.xlu0 %1582
        %v1584 = vrot.slane %v1583, 4
        %v1585 = vadd.f32 %v1583, %v1584
        %v1586 = vrot.slane %v1585, 2
        %v1587 = vadd.f32 %v1585, %v1586
        %v1588 = vrot.slane %v1587, 1
        %v1589 = vadd.f32 %v1587, %v1588
        %s1590 = vtos %v1589
        %v1591 = vstv %s1590
        %v1592 = vadd.f32 %v1574, %v1591
        %1593 = vst.msk [vmem:[#allocation5] sm:$0x1] %vm1536, %v1592
        %v1594 = vld [vmem:[#allocation6] sm:$0x1]
        %v1595 = vmul.f32 %v1297, %v1493
        %v1596 = vmul.f32 %v1304, %v1498
        %v1597 = vmul.f32 %v1311, %v1503
        %v1598 = vmul.f32 %v1318, %v1508
        %v1599 = vadd.f32 %v1595, %v1596
        %v1600 = vadd.f32 %v1599, %v1597
        %v1601 = vadd.f32 %v1600, %v1598
        %1602 = vadd.xlane.f32.xlu0 %v1601
        %v1603 = vpop.xlane.xlu0 %1602
        %v1604 = vrot.slane %v1603, 4
        %v1605 = vadd.f32 %v1603, %v1604
        %v1606 = vrot.slane %v1605, 2
        %v1607 = vadd.f32 %v1605, %v1606
        %v1608 = vrot.slane %v1607, 1
        %v1609 = vadd.f32 %v1607, %v1608
        %s1610 = vtos %v1609
        %v1611 = vstv %s1610
        %v1612 = vadd.f32 %v1594, %v1611
        %1613 = vst.msk [vmem:[#allocation6] sm:$0x1] %vm1536, %v1612
        %p1614 = scmp.eq.s32.totalorder %s21, 1
        // Predicated region
        $region61: #{_custom_loss_fn.1} parent=55 // pred_check
          %p1615 = pneg %p1614
        $region62: #{_custom_loss_fn.1} parent=55 // pred_check_branch
          %1617 = sbr.rel (%p1615) target = $region64
        $region63: #{_custom_loss_fn.1} parent=55 // pred_region
          %v1618 = vld [vmem:[#allocation4] sm:$0x1]
          %v1619 = vld [vmem:[#allocation5] sm:$0x1]
          %v1620 = vld [vmem:[#allocation6] sm:$0x1]
          %v1621 = vld [vmem:[#allocation2] sm:$0x1]
          %v1622 = vld [vmem:[#allocation3] sm:$0x1]
          %v1623 = vrcp.pop %v1621
          %v1624 = vmul.f32 %v1622, %v1623
          %v1625 = vmul.f32 %v1618, %v1624
          %v1626 = vrcp.pop %v1622
          %v1627 = vmul.f32 %v1621, %v1626
          %v1628 = vmul.f32 %v1619, %v1627
          %v1629 = vadd.f32 %v1625, %v1628
          %v1630 = vmul.f32 %v1620, 2.0
          %v1631 = vsub.f32 %v1629, %v1630
          %v1632 = vmul.f32 %v1618, %v1619
          %v1633 = vrsqrt.pop %v1632
          %v1634 = vmul.f32 %v1631, %v1633
          %1635 = vst.msk [vmem:[#allocation7] sm:$0x1] %vm1536, %v1634
        $region64: #{_custom_loss_fn.1} parent=55 // pred_fallthru
          _
        // Predicated region
        $region65: #{_custom_loss_fn.1} parent=55 // pred_check
          %p1636 = pneg %p253
        $region66: #{_custom_loss_fn.1} parent=55 // pred_check_branch
          %1638 = sbr.rel (%p1636) target = $region68
        $region67: #{_custom_loss_fn.1} parent=55 // pred_region
          %s1640 = ssub.s32 16, 16
          %1641 = vsyncadd [#allocation8], %s1640
          %s1643 = sshll.u32 [#allocation7], 4
          %s1644 = int_to_ptr.vmem [resolvable:$true] %s1643
          %1646 = dma.vmem_to_hbm [thread:$0]  %s1644, 16, %s9, [#allocation8]
        $region68: #{_custom_loss_fn.1} parent=55 // pred_fallthru
          _
        // Predicated region
        $region69: #{_custom_loss_fn.1} parent=55 // pred_check
          %p1647 = pneg %p253
        $region70: #{_custom_loss_fn.1} parent=55 // pred_check_branch
          %1649 = sbr.rel (%p1647) target = $region72
        $region71: #{_custom_loss_fn.1} parent=55 // pred_region
          %1650 = dma.done [#allocation8], 16
        $region72: #{_custom_loss_fn.1} parent=55 // pred_fallthru
          _
      $region56: #{_custom_loss_fn.1} parent=5 // pred_fallthru
        _
      %p1651 = scmp.le.s32.totalorder 2, %s16
      // Predicated region
      $region73: #{_custom_loss_fn.1} parent=5 // pred_check
        %p1652 = pneg %p1651
      $region74: #{_custom_loss_fn.1} parent=5 // pred_check_branch
        %1654 = sbr.rel (%p1652) target = $region76
      $region75: #{_custom_loss_fn.1} parent=5 // pred_region
        %s1655 = ssub.s32 %s16, 2
      $region76: #{_custom_loss_fn.1} parent=5 // pred_fallthru
        _
    $region6: #{_custom_loss_fn.1} parent=1 // loop_footer
      %s20 = sadd.s32 1, %s16
    $region7: #{_custom_loss_fn.1} parent=1 // loop_footer_branch
      %15 = sbr.rel target = $region3
    $region8: #{_custom_loss_fn.1} parent=1 // loop_exit
      _
    %1656 = vsyncpa [#allocation8], 1
    %s1657 = scalar_lea.sflag [#allocation8], 1
    %1658 = vsyncpa %s1657, 1

</llo_original>
